<compile_context>
chip_gen: v5e
topology: v5e:2x2
jax: 0.10.0
libtpu: 0.0.40
codegen_flags: <defaults>
</compile_context>

<pallas_src>
import jax
import jax.numpy as jnp
from jax.experimental import pallas as pl
from jax.experimental.pallas import tpu as pltpu

# --- small config consistent with the module (inp_size == hid_size required
# --- by the `out = out + x` residual, as in the PyTorch defaults) ------------
INP = 32            # inp_size
HID = 32            # hid_size
SEQ = 8             # self.seq
NCLASS = 4
CONV_PAD_EACH = 137  # hard-coded F.pad(x, (137, 137)) in forward
BN_EPS = 1e-5

VMEM = pltpu.MemorySpace.VMEM
SMEM = pltpu.MemorySpace.SMEM


# ------------------------------ fused kernel ---------------------------------

def _make_fused_kernel(B, L_out, n_seq, NP):
    """NP = n_seq padded up to a multiple of 8 (tile-aligned GRU row blocks)."""
    padded_len = L_out + 2 * CONV_PAD_EACH

    def kernel(taps_ref, wtap_ref, cb_ref,
               w1_ref, b1_ref,
               wih_ref, bihf_ref, whh_ref, bhhn_ref,
               w2_ref, b2_ref, w3_ref, b3_ref,
               out_ref, rows_scr):
        # ---- Conv1d(3->1, k=3, stride=2, pad=1) as a 9-tap VPU FMA ----------
        # taps_ref: (9, B, L_out); wtap_ref: SMEM (9,); cb_ref: SMEM (1,)
        conv = cb_ref[0] + taps_ref[0] * wtap_ref[0]                # (B, L_out)
        for i in range(1, 9):
            conv = conv + taps_ref[i] * wtap_ref[i]

        # ---- F.pad(137,137) + view(-1, seq), stored TIME-MAJOR --------------
        # natural row r holds (n, t) = (r // SEQ, r % SEQ); it is stored at
        # time-major row t*NP + n so every GRU step is a tile-aligned slice.
        # NOTE: this mapping is tied to the hard-coded pad (137) and SEQ=8.
        rows_scr[...] = jnp.zeros_like(rows_scr)
        for b in range(B):                          # static trace-time scatter
            j = 0
            while j < L_out:
                g = b * padded_len + CONV_PAD_EACH + j
                row, col = g // SEQ, g % SEQ
                seglen = min(SEQ - col, L_out - j)
                n_idx, t_idx = row // SEQ, row % SEQ
                row_tm = t_idx * NP + n_idx
                rows_scr[row_tm:row_tm + 1, col:col + seglen] = \
                    conv[b:b + 1, j:j + seglen]
                j += seglen

        rows = rows_scr[...]                                        # (SEQ*NP, SEQ)

        # ---- linear1 + BN1(eval, folded into w1/b1) + ReLU (dropout = id) ---
        h1 = jnp.maximum(
            jnp.dot(rows, w1_ref[...], preferred_element_type=jnp.float32)
            + b1_ref[...], 0.0)                                     # (SEQ*NP, INP)

        # ---- GRU: all input projections in ONE matmul, h0 = 0 ---------------
        # b_hh[r|z] already folded into bihf; only the n-gate b_hh is applied
        # inside the loop (before the r* multiply), matching torch GRU.
        gi_all = (jnp.dot(h1, wih_ref[...], preferred_element_type=jnp.float32)
                  + bihf_ref[...])                                  # (SEQ*NP, 3H)
        whh = whh_ref[...]                                          # hoisted
        bhh_n = bhhn_ref[...]                                       # (1, H)
        H = HID
        h = jnp.zeros((NP, H), jnp.float32)
        for t in range(SEQ):                    # static unroll, only h@Whh serial
            gi = gi_all[t * NP:(t + 1) * NP, :]                     # aligned view
            gh = jnp.dot(h, whh, preferred_element_type=jnp.float32)
            r = jax.nn.sigmoid(gi[:, 0:H] + gh[:, 0:H])
            z = jax.nn.sigmoid(gi[:, H:2 * H] + gh[:, H:2 * H])
            n = jnp.tanh(gi[:, 2 * H:3 * H] + r * (gh[:, 2 * H:3 * H] + bhh_n))
            h = n + z * (h - n)                                     # (1-z)n + z h

        # ---- out = out + x, take [:, -1, :] ----------------------------------
        y = h + h1[(SEQ - 1) * NP:SEQ * NP, :]                      # (NP, HID)

        # ---- linear2 + BN2(eval, folded) + ReLU (+dropout id) + linear3 ------
        y = jnp.maximum(
            jnp.dot(y, w2_ref[...], preferred_element_type=jnp.float32)
            + b2_ref[...], 0.0)
        y = (jnp.dot(y, w3_ref[...], preferred_element_type=jnp.float32)
             + b3_ref[...])                                         # (NP, NCLASS)
        out_ref[...] = y[:n_seq, :]                                 # drop pad rows

    return kernel


# --------------------------- one-time parameter prep ---------------------------

def prepare_params(p):
    """Fold BN (eval) into the linears, fold GRU r/z hidden biases into b_ih,
    transpose everything for row-major matmuls.  Call ONCE, reuse per call."""
    s1 = p["bn1_gamma"] / jnp.sqrt(p["bn1_var"] + BN_EPS)
    w1f = (p["w1"] * s1[:, None]).T                                 # (SEQ, INP)
    b1f = ((p["b1"] - p["bn1_mean"]) * s1 + p["bn1_beta"]).reshape(1, -1)
    s2 = p["bn2_gamma"] / jnp.sqrt(p["bn2_var"] + BN_EPS)
    w2f = (p["w2"] * s2[:, None]).T                                 # (INP, HID)
    b2f = ((p["b2"] - p["bn2_mean"]) * s2 + p["bn2_beta"]).reshape(1, -1)

    bhh = p["b_hh"]
    bihf = (p["b_ih"] + jnp.concatenate(
        [bhh[:HID], bhh[HID:2 * HID], jnp.zeros((HID,), jnp.float32)])
            ).reshape(1, -1)                                        # (1, 3H)
    bhh_n = bhh[2 * HID:3 * HID].reshape(1, -1)                     # (1, H)

    return dict(
        wtap=p["conv_w"].reshape(9).astype(jnp.float32),  # (c,k) flatten order
        cb=p["conv_b"].reshape(1).astype(jnp.float32),
        w1f=w1f, b1f=b1f,
        wih=p["w_ih"].T,                                  # (INP, 3H), [r|z|n]
        whh=p["w_hh"].T,                                  # (HID, 3H)
        bihf=bihf, bhh_n=bhh_n,
        w2f=w2f, b2f=b2f,
        w3t=p["w3"].T, b3=p["b3"].reshape(1, -1),
    )


# ------------------------------ forward (glue) --------------------------------

def net_forward(x, q):
    """q = prepare_params(raw_params); only x-dependent prep happens here."""
    B, C, L = x.shape
    assert C >= 3, "forward uses x[:, :3, :]"
    L_out = (L + 2 - 3) // 2 + 1
    padded_len = L_out + 2 * CONV_PAD_EACH
    assert (B * padded_len) % SEQ == 0, "x.view(-1, seq) must be exact"
    n_rows = (B * padded_len) // SEQ
    assert n_rows % SEQ == 0, "x.view(-1, seq, inp_size) must be exact"
    n_seq = n_rows // SEQ
    NP = max(8, ((n_seq + 7) // 8) * 8)        # pad row-batch to sublane tile

    # 9 static strided slices (no gather / im2col):
    # taps[3*c + k, b, j] = xpad[b, c, 2*j + k]
    xc = x[:, :3, :].astype(jnp.float32)
    xp = jnp.pad(xc, ((0, 0), (0, 0), (1, 1)))
    taps = jnp.stack(
        [xp[:, c, k:k + 2 * L_out - 1:2] for c in range(3) for k in range(3)],
        axis=0)                                                     # (9, B, L_out)

    kernel = _make_fused_kernel(B, L_out, n_seq, NP)
    return pl.pallas_call(
        kernel,
        out_shape=jax.ShapeDtypeStruct((n_seq, NCLASS), jnp.float32),
        in_specs=[
            pl.BlockSpec(memory_space=VMEM),      # taps
            pl.BlockSpec(memory_space=SMEM),      # conv weights (scalars)
            pl.BlockSpec(memory_space=SMEM),      # conv bias (scalar)
        ] + [pl.BlockSpec(memory_space=VMEM)] * 10,
        out_specs=pl.BlockSpec(memory_space=VMEM),
        scratch_shapes=[pltpu.VMEM((SEQ * NP, SEQ), jnp.float32)],
    )(taps, q["wtap"], q["cb"], q["w1f"], q["b1f"], q["wih"], q["bihf"],
      q["whh"], q["bhh_n"], q["w2f"], q["b2f"], q["w3t"], q["b3"])


# --------------------------- pure-JAX reference --------------------------------

def net_reference(x, p):
    xc = x[:, :3, :]
    out = jax.lax.conv_general_dilated(
        xc, p["conv_w"], window_strides=(2,), padding=((1, 1),),
        dimension_numbers=("NCH", "OIH", "NCH"))
    out = out + p["conv_b"][None, :, None]
    out = jnp.pad(out, ((0, 0), (0, 0), (CONV_PAD_EACH, CONV_PAD_EACH)))
    h = out.reshape(-1, SEQ)
    h = h @ p["w1"].T + p["b1"]
    h = ((h - p["bn1_mean"]) / jnp.sqrt(p["bn1_var"] + BN_EPS)
         * p["bn1_gamma"] + p["bn1_beta"])
    h = jnp.maximum(h, 0.0)
    x3d = h.reshape(-1, SEQ, INP)
    Bp, H = x3d.shape[0], HID
    hs = jnp.zeros((Bp, H), jnp.float32)
    for t in range(SEQ):
        xt = x3d[:, t, :]
        gi = xt @ p["w_ih"].T + p["b_ih"]
        gh = hs @ p["w_hh"].T + p["b_hh"]
        r = jax.nn.sigmoid(gi[:, :H] + gh[:, :H])
        z = jax.nn.sigmoid(gi[:, H:2 * H] + gh[:, H:2 * H])
        n = jnp.tanh(gi[:, 2 * H:] + r * gh[:, 2 * H:])
        hs = (1.0 - z) * n + z * hs
    y = hs + x3d[:, -1, :]
    y = y @ p["w2"].T + p["b2"]
    y = ((y - p["bn2_mean"]) / jnp.sqrt(p["bn2_var"] + BN_EPS)
         * p["bn2_gamma"] + p["bn2_beta"])
    y = jnp.maximum(y, 0.0)
    return y @ p["w3"].T + p["b3"]


# ------------------------------ parameters -------------------------------------

def init_params(key):
    ks = jax.random.split(key, 17)

    def xavier(k, shape):                 # torch nn.init.xavier_normal_
        fan_out, fan_in = shape
        std = (2.0 / (fan_in + fan_out)) ** 0.5
        return std * jax.random.normal(k, shape, jnp.float32)

    bound = 1.0 / (HID ** 0.5)            # torch GRU default uniform init

    def unif(k, shape):
        return jax.random.uniform(k, shape, jnp.float32, -bound, bound)

    # Non-trivial BatchNorm running stats / affine params so the eval-mode
    # fold is actually exercised.
    return dict(
        conv_w=0.3 * jax.random.normal(ks[0], (1, 3, 3), jnp.float32),
        conv_b=0.1 * jax.random.normal(ks[1], (1,), jnp.float32),
        w1=xavier(ks[2], (INP, SEQ)), b1=jnp.zeros((INP,), jnp.float32),
        w_ih=unif(ks[3], (3 * HID, INP)), w_hh=unif(ks[4], (3 * HID, HID)),
        b_ih=unif(ks[5], (3 * HID,)), b_hh=unif(ks[6], (3 * HID,)),
        w2=xavier(ks[7], (HID, INP)), b2=jnp.zeros((HID,), jnp.float32),
        w3=xavier(ks[8], (NCLASS, HID)), b3=jnp.zeros((NCLASS,), jnp.float32),
        bn1_gamma=jax.random.uniform(ks[9], (INP,), jnp.float32, 0.8, 1.2),
        bn1_beta=0.1 * jax.random.normal(ks[10], (INP,), jnp.float32),
        bn1_mean=0.1 * jax.random.normal(ks[11], (INP,), jnp.float32),
        bn1_var=jax.random.uniform(ks[12], (INP,), jnp.float32, 0.5, 1.5),
        bn2_gamma=jax.random.uniform(ks[13], (HID,), jnp.float32, 0.8, 1.2),
        bn2_beta=0.1 * jax.random.normal(ks[14], (HID,), jnp.float32),
        bn2_mean=0.1 * jax.random.normal(ks[15], (HID,), jnp.float32),
        bn2_var=jax.random.uniform(ks[16], (HID,), jnp.float32, 0.5, 1.5),
    )


if __name__ == "__main__":
    key = jax.random.PRNGKey(0)
    kx, kp = jax.random.split(key)
    # (B=2, C=4, L=27): forward uses x[:, :3, :]; L chosen so that after the
    # conv (L_out=14) and the hard-coded pad of 137 per side (288 per batch),
    # .view(-1, seq) and .view(-1, seq, inp_size) are exact (n_seq = 9).
    x = jax.random.normal(kx, (2, 4, 27), jnp.float32)
    params = init_params(kp)

    prepped = jax.tree_util.tree_map(jax.block_until_ready,
                                     prepare_params(params))   # once, hoisted
    fwd = jax.jit(net_forward)
    out = jax.block_until_ready(fwd(x, prepped))
    ref = net_reference(x, params)

    assert out.shape == (9, NCLASS), out.shape
    max_err = float(jnp.max(jnp.abs(out - ref)))
    assert jnp.allclose(out, ref, rtol=2e-3, atol=2e-3), max_err
    print("KERNEL_OK")
</pallas_src>

<mosaic_0001>
module attributes {stable_mosaic.version = 11 : i64} {
  func.func @kernel(%arg0: memref<9x2x14xf32, #tpu.memory_space<vmem>>, %arg1: memref<9xf32, #tpu.memory_space<smem>>, %arg2: memref<1xf32, #tpu.memory_space<smem>>, %arg3: memref<8x32xf32, #tpu.memory_space<vmem>>, %arg4: memref<1x32xf32, #tpu.memory_space<vmem>>, %arg5: memref<32x96xf32, #tpu.memory_space<vmem>>, %arg6: memref<1x96xf32, #tpu.memory_space<vmem>>, %arg7: memref<32x96xf32, #tpu.memory_space<vmem>>, %arg8: memref<1x32xf32, #tpu.memory_space<vmem>>, %arg9: memref<32x32xf32, #tpu.memory_space<vmem>>, %arg10: memref<1x32xf32, #tpu.memory_space<vmem>>, %arg11: memref<32x4xf32, #tpu.memory_space<vmem>>, %arg12: memref<1x4xf32, #tpu.memory_space<vmem>>, %arg13: memref<9x4xf32, #tpu.memory_space<vmem>>, %arg14: memref<128x8xf32, #tpu.memory_space<vmem>>) attributes {dimension_semantics = [], scalar_prefetch = 0 : i64, scratch_operands = 1 : i64, tpu.core_type = #tpu.core_type<tc>} {
    %c0 = arith.constant 0 : index
    %0 = memref.load %arg2[%c0] : memref<1xf32, #tpu.memory_space<smem>>
    %c0_0 = arith.constant 0 : index
    %c0_1 = arith.constant 0 : index
    %c0_2 = arith.constant 0 : index
    %1 = vector.load %arg0[%c0_0, %c0_1, %c0_2] : memref<9x2x14xf32, #tpu.memory_space<vmem>>, vector<1x2x14xf32>
    %2 = vector.shape_cast %1 : vector<1x2x14xf32> to vector<2x14xf32>
    %c0_3 = arith.constant 0 : index
    %3 = memref.load %arg1[%c0_3] : memref<9xf32, #tpu.memory_space<smem>>
    %4 = vector.broadcast %3 : f32 to vector<2x14xf32>
    %5 = arith.mulf %2, %4 : vector<2x14xf32>
    %6 = vector.broadcast %0 : f32 to vector<2x14xf32>
    %7 = arith.addf %6, %5 : vector<2x14xf32>
    %c1 = arith.constant 1 : index
    %c0_4 = arith.constant 0 : index
    %c0_5 = arith.constant 0 : index
    %8 = vector.load %arg0[%c1, %c0_4, %c0_5] : memref<9x2x14xf32, #tpu.memory_space<vmem>>, vector<1x2x14xf32>
    %9 = vector.shape_cast %8 : vector<1x2x14xf32> to vector<2x14xf32>
    %c1_6 = arith.constant 1 : index
    %10 = memref.load %arg1[%c1_6] : memref<9xf32, #tpu.memory_space<smem>>
    %11 = vector.broadcast %10 : f32 to vector<2x14xf32>
    %12 = arith.mulf %9, %11 : vector<2x14xf32>
    %13 = arith.addf %7, %12 : vector<2x14xf32>
    %c2 = arith.constant 2 : index
    %c0_7 = arith.constant 0 : index
    %c0_8 = arith.constant 0 : index
    %14 = vector.load %arg0[%c2, %c0_7, %c0_8] : memref<9x2x14xf32, #tpu.memory_space<vmem>>, vector<1x2x14xf32>
    %15 = vector.shape_cast %14 : vector<1x2x14xf32> to vector<2x14xf32>
    %c2_9 = arith.constant 2 : index
    %16 = memref.load %arg1[%c2_9] : memref<9xf32, #tpu.memory_space<smem>>
    %17 = vector.broadcast %16 : f32 to vector<2x14xf32>
    %18 = arith.mulf %15, %17 : vector<2x14xf32>
    %19 = arith.addf %13, %18 : vector<2x14xf32>
    %c3 = arith.constant 3 : index
    %c0_10 = arith.constant 0 : index
    %c0_11 = arith.constant 0 : index
    %20 = vector.load %arg0[%c3, %c0_10, %c0_11] : memref<9x2x14xf32, #tpu.memory_space<vmem>>, vector<1x2x14xf32>
    %21 = vector.shape_cast %20 : vector<1x2x14xf32> to vector<2x14xf32>
    %c3_12 = arith.constant 3 : index
    %22 = memref.load %arg1[%c3_12] : memref<9xf32, #tpu.memory_space<smem>>
    %23 = vector.broadcast %22 : f32 to vector<2x14xf32>
    %24 = arith.mulf %21, %23 : vector<2x14xf32>
    %25 = arith.addf %19, %24 : vector<2x14xf32>
    %c4 = arith.constant 4 : index
    %c0_13 = arith.constant 0 : index
    %c0_14 = arith.constant 0 : index
    %26 = vector.load %arg0[%c4, %c0_13, %c0_14] : memref<9x2x14xf32, #tpu.memory_space<vmem>>, vector<1x2x14xf32>
    %27 = vector.shape_cast %26 : vector<1x2x14xf32> to vector<2x14xf32>
    %c4_15 = arith.constant 4 : index
    %28 = memref.load %arg1[%c4_15] : memref<9xf32, #tpu.memory_space<smem>>
    %29 = vector.broadcast %28 : f32 to vector<2x14xf32>
    %30 = arith.mulf %27, %29 : vector<2x14xf32>
    %31 = arith.addf %25, %30 : vector<2x14xf32>
    %c5 = arith.constant 5 : index
    %c0_16 = arith.constant 0 : index
    %c0_17 = arith.constant 0 : index
    %32 = vector.load %arg0[%c5, %c0_16, %c0_17] : memref<9x2x14xf32, #tpu.memory_space<vmem>>, vector<1x2x14xf32>
    %33 = vector.shape_cast %32 : vector<1x2x14xf32> to vector<2x14xf32>
    %c5_18 = arith.constant 5 : index
    %34 = memref.load %arg1[%c5_18] : memref<9xf32, #tpu.memory_space<smem>>
    %35 = vector.broadcast %34 : f32 to vector<2x14xf32>
    %36 = arith.mulf %33, %35 : vector<2x14xf32>
    %37 = arith.addf %31, %36 : vector<2x14xf32>
    %c6 = arith.constant 6 : index
    %c0_19 = arith.constant 0 : index
    %c0_20 = arith.constant 0 : index
    %38 = vector.load %arg0[%c6, %c0_19, %c0_20] : memref<9x2x14xf32, #tpu.memory_space<vmem>>, vector<1x2x14xf32>
    %39 = vector.shape_cast %38 : vector<1x2x14xf32> to vector<2x14xf32>
    %c6_21 = arith.constant 6 : index
    %40 = memref.load %arg1[%c6_21] : memref<9xf32, #tpu.memory_space<smem>>
    %41 = vector.broadcast %40 : f32 to vector<2x14xf32>
    %42 = arith.mulf %39, %41 : vector<2x14xf32>
    %43 = arith.addf %37, %42 : vector<2x14xf32>
    %c7 = arith.constant 7 : index
    %c0_22 = arith.constant 0 : index
    %c0_23 = arith.constant 0 : index
    %44 = vector.load %arg0[%c7, %c0_22, %c0_23] : memref<9x2x14xf32, #tpu.memory_space<vmem>>, vector<1x2x14xf32>
    %45 = vector.shape_cast %44 : vector<1x2x14xf32> to vector<2x14xf32>
    %c7_24 = arith.constant 7 : index
    %46 = memref.load %arg1[%c7_24] : memref<9xf32, #tpu.memory_space<smem>>
    %47 = vector.broadcast %46 : f32 to vector<2x14xf32>
    %48 = arith.mulf %45, %47 : vector<2x14xf32>
    %49 = arith.addf %43, %48 : vector<2x14xf32>
    %c8 = arith.constant 8 : index
    %c0_25 = arith.constant 0 : index
    %c0_26 = arith.constant 0 : index
    %50 = vector.load %arg0[%c8, %c0_25, %c0_26] : memref<9x2x14xf32, #tpu.memory_space<vmem>>, vector<1x2x14xf32>
    %51 = vector.shape_cast %50 : vector<1x2x14xf32> to vector<2x14xf32>
    %c8_27 = arith.constant 8 : index
    %52 = memref.load %arg1[%c8_27] : memref<9xf32, #tpu.memory_space<smem>>
    %53 = vector.broadcast %52 : f32 to vector<2x14xf32>
    %54 = arith.mulf %51, %53 : vector<2x14xf32>
    %55 = arith.addf %49, %54 : vector<2x14xf32>
    %cst = arith.constant 0.000000e+00 : f32
    %56 = vector.broadcast %cst : f32 to vector<128x8xf32>
    %c0_28 = arith.constant 0 : index
    %c0_29 = arith.constant 0 : index
    %57 = vector.load %arg14[%c0_28, %c0_29] : memref<128x8xf32, #tpu.memory_space<vmem>>, vector<128x8xf32>
    tpu.vector_store %arg14[%c0_28, %c0_29], %56 {strides = array<i32>} : memref<128x8xf32, #tpu.memory_space<vmem>>, vector<128x8xf32>,
    %58 = vector.extract_strided_slice %55 {offsets = [0, 0], sizes = [1, 7], strides = [1, 1]} : vector<2x14xf32> to vector<1x7xf32>
    %c18 = arith.constant 18 : index
    %c1_30 = arith.constant 1 : index
    %59 = vector.load %arg14[%c18, %c1_30] : memref<128x8xf32, #tpu.memory_space<vmem>>, vector<1x7xf32>
    tpu.vector_store %arg14[%c18, %c1_30], %58 {strides = array<i32>} : memref<128x8xf32, #tpu.memory_space<vmem>>, vector<1x7xf32>,
    %60 = vector.extract_strided_slice %55 {offsets = [0, 7], sizes = [1, 7], strides = [1, 1]} : vector<2x14xf32> to vector<1x7xf32>
    %c34 = arith.constant 34 : index
    %c0_31 = arith.constant 0 : index
    %61 = vector.load %arg14[%c34, %c0_31] : memref<128x8xf32, #tpu.memory_space<vmem>>, vector<1x7xf32>
    tpu.vector_store %arg14[%c34, %c0_31], %60 {strides = array<i32>} : memref<128x8xf32, #tpu.memory_space<vmem>>, vector<1x7xf32>,
    %62 = vector.extract_strided_slice %55 {offsets = [1, 0], sizes = [1, 7], strides = [1, 1]} : vector<2x14xf32> to vector<1x7xf32>
    %c86 = arith.constant 86 : index
    %c1_32 = arith.constant 1 : index
    %63 = vector.load %arg14[%c86, %c1_32] : memref<128x8xf32, #tpu.memory_space<vmem>>, vector<1x7xf32>
    tpu.vector_store %arg14[%c86, %c1_32], %62 {strides = array<i32>} : memref<128x8xf32, #tpu.memory_space<vmem>>, vector<1x7xf32>,
    %64 = vector.extract_strided_slice %55 {offsets = [1, 7], sizes = [1, 7], strides = [1, 1]} : vector<2x14xf32> to vector<1x7xf32>
    %c102 = arith.constant 102 : index
    %c0_33 = arith.constant 0 : index
    %65 = vector.load %arg14[%c102, %c0_33] : memref<128x8xf32, #tpu.memory_space<vmem>>, vector<1x7xf32>
    tpu.vector_store %arg14[%c102, %c0_33], %64 {strides = array<i32>} : memref<128x8xf32, #tpu.memory_space<vmem>>, vector<1x7xf32>,
    %c0_34 = arith.constant 0 : index
    %c0_35 = arith.constant 0 : index
    %66 = vector.load %arg14[%c0_34, %c0_35] : memref<128x8xf32, #tpu.memory_space<vmem>>, vector<128x8xf32>
    %c0_36 = arith.constant 0 : index
    %c0_37 = arith.constant 0 : index
    %67 = vector.load %arg3[%c0_36, %c0_37] : memref<8x32xf32, #tpu.memory_space<vmem>>, vector<8x32xf32>
    %cst_38 = arith.constant dense<0.000000e+00> : vector<128x32xf32>
    %68 = tpu.matmul %66, %67, %cst_38 {dimension_numbers = #tpu.dot_dimension_numbers<[1], [0], [0], [1], [0, 0, 1, 1], [], []>} : vector<128x8xf32>, vector<8x32xf32>, vector<128x32xf32> -> vector<128x32xf32>
    %c0_39 = arith.constant 0 : index
    %c0_40 = arith.constant 0 : index
    %69 = vector.load %arg4[%c0_39, %c0_40] : memref<1x32xf32, #tpu.memory_space<vmem>>, vector<1x32xf32>
    %70 = vector.broadcast %69 : vector<1x32xf32> to vector<128x32xf32>
    %71 = arith.addf %68, %70 : vector<128x32xf32>
    %cst_41 = arith.constant 0.000000e+00 : f32
    %72 = vector.broadcast %cst_41 : f32 to vector<128x32xf32>
    %73 = arith.maximumf %71, %72 : vector<128x32xf32>
    %c0_42 = arith.constant 0 : index
    %c0_43 = arith.constant 0 : index
    %74 = vector.load %arg5[%c0_42, %c0_43] : memref<32x96xf32, #tpu.memory_space<vmem>>, vector<32x96xf32>
    %cst_44 = arith.constant dense<0.000000e+00> : vector<128x96xf32>
    %75 = tpu.matmul %73, %74, %cst_44 {dimension_numbers = #tpu.dot_dimension_numbers<[1], [0], [0], [1], [0, 0, 1, 1], [], []>} : vector<128x32xf32>, vector<32x96xf32>, vector<128x96xf32> -> vector<128x96xf32>
    %c0_45 = arith.constant 0 : index
    %c0_46 = arith.constant 0 : index
    %76 = vector.load %arg6[%c0_45, %c0_46] : memref<1x96xf32, #tpu.memory_space<vmem>>, vector<1x96xf32>
    %77 = vector.broadcast %76 : vector<1x96xf32> to vector<128x96xf32>
    %78 = arith.addf %75, %77 : vector<128x96xf32>
    %c0_47 = arith.constant 0 : index
    %c0_48 = arith.constant 0 : index
    %79 = vector.load %arg7[%c0_47, %c0_48] : memref<32x96xf32, #tpu.memory_space<vmem>>, vector<32x96xf32>
    %c0_49 = arith.constant 0 : index
    %c0_50 = arith.constant 0 : index
    %80 = vector.load %arg8[%c0_49, %c0_50] : memref<1x32xf32, #tpu.memory_space<vmem>>, vector<1x32xf32>
    %cst_51 = arith.constant 0.000000e+00 : f32
    %81 = vector.broadcast %cst_51 : f32 to vector<16x32xf32>
    %82 = vector.extract_strided_slice %78 {offsets = [0, 0], sizes = [16, 96], strides = [1, 1]} : vector<128x96xf32> to vector<16x96xf32>
    %cst_52 = arith.constant dense<0.000000e+00> : vector<16x96xf32>
    %83 = tpu.matmul %81, %79, %cst_52 {dimension_numbers = #tpu.dot_dimension_numbers<[1], [0], [0], [1], [0, 0, 1, 1], [], []>} : vector<16x32xf32>, vector<32x96xf32>, vector<16x96xf32> -> vector<16x96xf32>
    %84 = vector.extract_strided_slice %82 {offsets = [0, 0], sizes = [16, 32], strides = [1, 1]} : vector<16x96xf32> to vector<16x32xf32>
    %85 = vector.extract_strided_slice %83 {offsets = [0, 0], sizes = [16, 32], strides = [1, 1]} : vector<16x96xf32> to vector<16x32xf32>
    %86 = arith.addf %84, %85 : vector<16x32xf32>
    %87 = arith.negf %86 : vector<16x32xf32>
    %88 = math.exp %87 : vector<16x32xf32>
    %cst_53 = arith.constant 1.000000e+00 : f32
    %89 = vector.broadcast %cst_53 : f32 to vector<16x32xf32>
    %90 = arith.addf %89, %88 : vector<16x32xf32>
    %91 = arith.divf %89, %90 : vector<16x32xf32>
    %92 = vector.extract_strided_slice %82 {offsets = [0, 32], sizes = [16, 32], strides = [1, 1]} : vector<16x96xf32> to vector<16x32xf32>
    %93 = vector.extract_strided_slice %83 {offsets = [0, 32], sizes = [16, 32], strides = [1, 1]} : vector<16x96xf32> to vector<16x32xf32>
    %94 = arith.addf %92, %93 : vector<16x32xf32>
    %95 = arith.negf %94 : vector<16x32xf32>
    %96 = math.exp %95 : vector<16x32xf32>
    %cst_54 = arith.constant 1.000000e+00 : f32
    %97 = vector.broadcast %cst_54 : f32 to vector<16x32xf32>
    %98 = arith.addf %97, %96 : vector<16x32xf32>
    %99 = arith.divf %97, %98 : vector<16x32xf32>
    %100 = vector.extract_strided_slice %82 {offsets = [0, 64], sizes = [16, 32], strides = [1, 1]} : vector<16x96xf32> to vector<16x32xf32>
    %101 = vector.extract_strided_slice %83 {offsets = [0, 64], sizes = [16, 32], strides = [1, 1]} : vector<16x96xf32> to vector<16x32xf32>
    %102 = vector.broadcast %80 : vector<1x32xf32> to vector<16x32xf32>
    %103 = arith.addf %101, %102 : vector<16x32xf32>
    %104 = arith.mulf %91, %103 : vector<16x32xf32>
    %105 = arith.addf %100, %104 : vector<16x32xf32>
    %106 = math.tanh %105 : vector<16x32xf32>
    %107 = arith.subf %81, %106 : vector<16x32xf32>
    %108 = arith.mulf %99, %107 : vector<16x32xf32>
    %109 = arith.addf %106, %108 : vector<16x32xf32>
    %110 = vector.extract_strided_slice %78 {offsets = [16, 0], sizes = [16, 96], strides = [1, 1]} : vector<128x96xf32> to vector<16x96xf32>
    %cst_55 = arith.constant dense<0.000000e+00> : vector<16x96xf32>
    %111 = tpu.matmul %109, %79, %cst_55 {dimension_numbers = #tpu.dot_dimension_numbers<[1], [0], [0], [1], [0, 0, 1, 1], [], []>} : vector<16x32xf32>, vector<32x96xf32>, vector<16x96xf32> -> vector<16x96xf32>
    %112 = vector.extract_strided_slice %110 {offsets = [0, 0], sizes = [16, 32], strides = [1, 1]} : vector<16x96xf32> to vector<16x32xf32>
    %113 = vector.extract_strided_slice %111 {offsets = [0, 0], sizes = [16, 32], strides = [1, 1]} : vector<16x96xf32> to vector<16x32xf32>
    %114 = arith.addf %112, %113 : vector<16x32xf32>
    %115 = arith.negf %114 : vector<16x32xf32>
    %116 = math.exp %115 : vector<16x32xf32>
    %cst_56 = arith.constant 1.000000e+00 : f32
    %117 = vector.broadcast %cst_56 : f32 to vector<16x32xf32>
    %118 = arith.addf %117, %116 : vector<16x32xf32>
    %119 = arith.divf %117, %118 : vector<16x32xf32>
    %120 = vector.extract_strided_slice %110 {offsets = [0, 32], sizes = [16, 32], strides = [1, 1]} : vector<16x96xf32> to vector<16x32xf32>
    %121 = vector.extract_strided_slice %111 {offsets = [0, 32], sizes = [16, 32], strides = [1, 1]} : vector<16x96xf32> to vector<16x32xf32>
    %122 = arith.addf %120, %121 : vector<16x32xf32>
    %123 = arith.negf %122 : vector<16x32xf32>
    %124 = math.exp %123 : vector<16x32xf32>
    %cst_57 = arith.constant 1.000000e+00 : f32
    %125 = vector.broadcast %cst_57 : f32 to vector<16x32xf32>
    %126 = arith.addf %125, %124 : vector<16x32xf32>
    %127 = arith.divf %125, %126 : vector<16x32xf32>
    %128 = vector.extract_strided_slice %110 {offsets = [0, 64], sizes = [16, 32], strides = [1, 1]} : vector<16x96xf32> to vector<16x32xf32>
    %129 = vector.extract_strided_slice %111 {offsets = [0, 64], sizes = [16, 32], strides = [1, 1]} : vector<16x96xf32> to vector<16x32xf32>
    %130 = vector.broadcast %80 : vector<1x32xf32> to vector<16x32xf32>
    %131 = arith.addf %129, %130 : vector<16x32xf32>
    %132 = arith.mulf %119, %131 : vector<16x32xf32>
    %133 = arith.addf %128, %132 : vector<16x32xf32>
    %134 = math.tanh %133 : vector<16x32xf32>
    %135 = arith.subf %109, %134 : vector<16x32xf32>
    %136 = arith.mulf %127, %135 : vector<16x32xf32>
    %137 = arith.addf %134, %136 : vector<16x32xf32>
    %138 = vector.extract_strided_slice %78 {offsets = [32, 0], sizes = [16, 96], strides = [1, 1]} : vector<128x96xf32> to vector<16x96xf32>
    %cst_58 = arith.constant dense<0.000000e+00> : vector<16x96xf32>
    %139 = tpu.matmul %137, %79, %cst_58 {dimension_numbers = #tpu.dot_dimension_numbers<[1], [0], [0], [1], [0, 0, 1, 1], [], []>} : vector<16x32xf32>, vector<32x96xf32>, vector<16x96xf32> -> vector<16x96xf32>
    %140 = vector.extract_strided_slice %138 {offsets = [0, 0], sizes = [16, 32], strides = [1, 1]} : vector<16x96xf32> to vector<16x32xf32>
    %141 = vector.extract_strided_slice %139 {offsets = [0, 0], sizes = [16, 32], strides = [1, 1]} : vector<16x96xf32> to vector<16x32xf32>
    %142 = arith.addf %140, %141 : vector<16x32xf32>
    %143 = arith.negf %142 : vector<16x32xf32>
    %144 = math.exp %143 : vector<16x32xf32>
    %cst_59 = arith.constant 1.000000e+00 : f32
    %145 = vector.broadcast %cst_59 : f32 to vector<16x32xf32>
    %146 = arith.addf %145, %144 : vector<16x32xf32>
    %147 = arith.divf %145, %146 : vector<16x32xf32>
    %148 = vector.extract_strided_slice %138 {offsets = [0, 32], sizes = [16, 32], strides = [1, 1]} : vector<16x96xf32> to vector<16x32xf32>
    %149 = vector.extract_strided_slice %139 {offsets = [0, 32], sizes = [16, 32], strides = [1, 1]} : vector<16x96xf32> to vector<16x32xf32>
    %150 = arith.addf %148, %149 : vector<16x32xf32>
    %151 = arith.negf %150 : vector<16x32xf32>
    %152 = math.exp %151 : vector<16x32xf32>
    %cst_60 = arith.constant 1.000000e+00 : f32
    %153 = vector.broadcast %cst_60 : f32 to vector<16x32xf32>
    %154 = arith.addf %153, %152 : vector<16x32xf32>
    %155 = arith.divf %153, %154 : vector<16x32xf32>
    %156 = vector.extract_strided_slice %138 {offsets = [0, 64], sizes = [16, 32], strides = [1, 1]} : vector<16x96xf32> to vector<16x32xf32>
    %157 = vector.extract_strided_slice %139 {offsets = [0, 64], sizes = [16, 32], strides = [1, 1]} : vector<16x96xf32> to vector<16x32xf32>
    %158 = vector.broadcast %80 : vector<1x32xf32> to vector<16x32xf32>
    %159 = arith.addf %157, %158 : vector<16x32xf32>
    %160 = arith.mulf %147, %159 : vector<16x32xf32>
    %161 = arith.addf %156, %160 : vector<16x32xf32>
    %162 = math.tanh %161 : vector<16x32xf32>
    %163 = arith.subf %137, %162 : vector<16x32xf32>
    %164 = arith.mulf %155, %163 : vector<16x32xf32>
    %165 = arith.addf %162, %164 : vector<16x32xf32>
    %166 = vector.extract_strided_slice %78 {offsets = [48, 0], sizes = [16, 96], strides = [1, 1]} : vector<128x96xf32> to vector<16x96xf32>
    %cst_61 = arith.constant dense<0.000000e+00> : vector<16x96xf32>
    %167 = tpu.matmul %165, %79, %cst_61 {dimension_numbers = #tpu.dot_dimension_numbers<[1], [0], [0], [1], [0, 0, 1, 1], [], []>} : vector<16x32xf32>, vector<32x96xf32>, vector<16x96xf32> -> vector<16x96xf32>
    %168 = vector.extract_strided_slice %166 {offsets = [0, 0], sizes = [16, 32], strides = [1, 1]} : vector<16x96xf32> to vector<16x32xf32>
    %169 = vector.extract_strided_slice %167 {offsets = [0, 0], sizes = [16, 32], strides = [1, 1]} : vector<16x96xf32> to vector<16x32xf32>
    %170 = arith.addf %168, %169 : vector<16x32xf32>
    %171 = arith.negf %170 : vector<16x32xf32>
    %172 = math.exp %171 : vector<16x32xf32>
    %cst_62 = arith.constant 1.000000e+00 : f32
    %173 = vector.broadcast %cst_62 : f32 to vector<16x32xf32>
    %174 = arith.addf %173, %172 : vector<16x32xf32>
    %175 = arith.divf %173, %174 : vector<16x32xf32>
    %176 = vector.extract_strided_slice %166 {offsets = [0, 32], sizes = [16, 32], strides = [1, 1]} : vector<16x96xf32> to vector<16x32xf32>
    %177 = vector.extract_strided_slice %167 {offsets = [0, 32], sizes = [16, 32], strides = [1, 1]} : vector<16x96xf32> to vector<16x32xf32>
    %178 = arith.addf %176, %177 : vector<16x32xf32>
    %179 = arith.negf %178 : vector<16x32xf32>
    %180 = math.exp %179 : vector<16x32xf32>
    %cst_63 = arith.constant 1.000000e+00 : f32
    %181 = vector.broadcast %cst_63 : f32 to vector<16x32xf32>
    %182 = arith.addf %181, %180 : vector<16x32xf32>
    %183 = arith.divf %181, %182 : vector<16x32xf32>
    %184 = vector.extract_strided_slice %166 {offsets = [0, 64], sizes = [16, 32], strides = [1, 1]} : vector<16x96xf32> to vector<16x32xf32>
    %185 = vector.extract_strided_slice %167 {offsets = [0, 64], sizes = [16, 32], strides = [1, 1]} : vector<16x96xf32> to vector<16x32xf32>
    %186 = vector.broadcast %80 : vector<1x32xf32> to vector<16x32xf32>
    %187 = arith.addf %185, %186 : vector<16x32xf32>
    %188 = arith.mulf %175, %187 : vector<16x32xf32>
    %189 = arith.addf %184, %188 : vector<16x32xf32>
    %190 = math.tanh %189 : vector<16x32xf32>
    %191 = arith.subf %165, %190 : vector<16x32xf32>
    %192 = arith.mulf %183, %191 : vector<16x32xf32>
    %193 = arith.addf %190, %192 : vector<16x32xf32>
    %194 = vector.extract_strided_slice %78 {offsets = [64, 0], sizes = [16, 96], strides = [1, 1]} : vector<128x96xf32> to vector<16x96xf32>
    %cst_64 = arith.constant dense<0.000000e+00> : vector<16x96xf32>
    %195 = tpu.matmul %193, %79, %cst_64 {dimension_numbers = #tpu.dot_dimension_numbers<[1], [0], [0], [1], [0, 0, 1, 1], [], []>} : vector<16x32xf32>, vector<32x96xf32>, vector<16x96xf32> -> vector<16x96xf32>
    %196 = vector.extract_strided_slice %194 {offsets = [0, 0], sizes = [16, 32], strides = [1, 1]} : vector<16x96xf32> to vector<16x32xf32>
    %197 = vector.extract_strided_slice %195 {offsets = [0, 0], sizes = [16, 32], strides = [1, 1]} : vector<16x96xf32> to vector<16x32xf32>
    %198 = arith.addf %196, %197 : vector<16x32xf32>
    %199 = arith.negf %198 : vector<16x32xf32>
    %200 = math.exp %199 : vector<16x32xf32>
    %cst_65 = arith.constant 1.000000e+00 : f32
    %201 = vector.broadcast %cst_65 : f32 to vector<16x32xf32>
    %202 = arith.addf %201, %200 : vector<16x32xf32>
    %203 = arith.divf %201, %202 : vector<16x32xf32>
    %204 = vector.extract_strided_slice %194 {offsets = [0, 32], sizes = [16, 32], strides = [1, 1]} : vector<16x96xf32> to vector<16x32xf32>
    %205 = vector.extract_strided_slice %195 {offsets = [0, 32], sizes = [16, 32], strides = [1, 1]} : vector<16x96xf32> to vector<16x32xf32>
    %206 = arith.addf %204, %205 : vector<16x32xf32>
    %207 = arith.negf %206 : vector<16x32xf32>
    %208 = math.exp %207 : vector<16x32xf32>
    %cst_66 = arith.constant 1.000000e+00 : f32
    %209 = vector.broadcast %cst_66 : f32 to vector<16x32xf32>
    %210 = arith.addf %209, %208 : vector<16x32xf32>
    %211 = arith.divf %209, %210 : vector<16x32xf32>
    %212 = vector.extract_strided_slice %194 {offsets = [0, 64], sizes = [16, 32], strides = [1, 1]} : vector<16x96xf32> to vector<16x32xf32>
    %213 = vector.extract_strided_slice %195 {offsets = [0, 64], sizes = [16, 32], strides = [1, 1]} : vector<16x96xf32> to vector<16x32xf32>
    %214 = vector.broadcast %80 : vector<1x32xf32> to vector<16x32xf32>
    %215 = arith.addf %213, %214 : vector<16x32xf32>
    %216 = arith.mulf %203, %215 : vector<16x32xf32>
    %217 = arith.addf %212, %216 : vector<16x32xf32>
    %218 = math.tanh %217 : vector<16x32xf32>
    %219 = arith.subf %193, %218 : vector<16x32xf32>
    %220 = arith.mulf %211, %219 : vector<16x32xf32>
    %221 = arith.addf %218, %220 : vector<16x32xf32>
    %222 = vector.extract_strided_slice %78 {offsets = [80, 0], sizes = [16, 96], strides = [1, 1]} : vector<128x96xf32> to vector<16x96xf32>
    %cst_67 = arith.constant dense<0.000000e+00> : vector<16x96xf32>
    %223 = tpu.matmul %221, %79, %cst_67 {dimension_numbers = #tpu.dot_dimension_numbers<[1], [0], [0], [1], [0, 0, 1, 1], [], []>} : vector<16x32xf32>, vector<32x96xf32>, vector<16x96xf32> -> vector<16x96xf32>
    %224 = vector.extract_strided_slice %222 {offsets = [0, 0], sizes = [16, 32], strides = [1, 1]} : vector<16x96xf32> to vector<16x32xf32>
    %225 = vector.extract_strided_slice %223 {offsets = [0, 0], sizes = [16, 32], strides = [1, 1]} : vector<16x96xf32> to vector<16x32xf32>
    %226 = arith.addf %224, %225 : vector<16x32xf32>
    %227 = arith.negf %226 : vector<16x32xf32>
    %228 = math.exp %227 : vector<16x32xf32>
    %cst_68 = arith.constant 1.000000e+00 : f32
    %229 = vector.broadcast %cst_68 : f32 to vector<16x32xf32>
    %230 = arith.addf %229, %228 : vector<16x32xf32>
    %231 = arith.divf %229, %230 : vector<16x32xf32>
    %232 = vector.extract_strided_slice %222 {offsets = [0, 32], sizes = [16, 32], strides = [1, 1]} : vector<16x96xf32> to vector<16x32xf32>
    %233 = vector.extract_strided_slice %223 {offsets = [0, 32], sizes = [16, 32], strides = [1, 1]} : vector<16x96xf32> to vector<16x32xf32>
    %234 = arith.addf %232, %233 : vector<16x32xf32>
    %235 = arith.negf %234 : vector<16x32xf32>
    %236 = math.exp %235 : vector<16x32xf32>
    %cst_69 = arith.constant 1.000000e+00 : f32
    %237 = vector.broadcast %cst_69 : f32 to vector<16x32xf32>
    %238 = arith.addf %237, %236 : vector<16x32xf32>
    %239 = arith.divf %237, %238 : vector<16x32xf32>
    %240 = vector.extract_strided_slice %222 {offsets = [0, 64], sizes = [16, 32], strides = [1, 1]} : vector<16x96xf32> to vector<16x32xf32>
    %241 = vector.extract_strided_slice %223 {offsets = [0, 64], sizes = [16, 32], strides = [1, 1]} : vector<16x96xf32> to vector<16x32xf32>
    %242 = vector.broadcast %80 : vector<1x32xf32> to vector<16x32xf32>
    %243 = arith.addf %241, %242 : vector<16x32xf32>
    %244 = arith.mulf %231, %243 : vector<16x32xf32>
    %245 = arith.addf %240, %244 : vector<16x32xf32>
    %246 = math.tanh %245 : vector<16x32xf32>
    %247 = arith.subf %221, %246 : vector<16x32xf32>
    %248 = arith.mulf %239, %247 : vector<16x32xf32>
    %249 = arith.addf %246, %248 : vector<16x32xf32>
    %250 = vector.extract_strided_slice %78 {offsets = [96, 0], sizes = [16, 96], strides = [1, 1]} : vector<128x96xf32> to vector<16x96xf32>
    %cst_70 = arith.constant dense<0.000000e+00> : vector<16x96xf32>
    %251 = tpu.matmul %249, %79, %cst_70 {dimension_numbers = #tpu.dot_dimension_numbers<[1], [0], [0], [1], [0, 0, 1, 1], [], []>} : vector<16x32xf32>, vector<32x96xf32>, vector<16x96xf32> -> vector<16x96xf32>
    %252 = vector.extract_strided_slice %250 {offsets = [0, 0], sizes = [16, 32], strides = [1, 1]} : vector<16x96xf32> to vector<16x32xf32>
    %253 = vector.extract_strided_slice %251 {offsets = [0, 0], sizes = [16, 32], strides = [1, 1]} : vector<16x96xf32> to vector<16x32xf32>
    %254 = arith.addf %252, %253 : vector<16x32xf32>
    %255 = arith.negf %254 : vector<16x32xf32>
    %256 = math.exp %255 : vector<16x32xf32>
    %cst_71 = arith.constant 1.000000e+00 : f32
    %257 = vector.broadcast %cst_71 : f32 to vector<16x32xf32>
    %258 = arith.addf %257, %256 : vector<16x32xf32>
    %259 = arith.divf %257, %258 : vector<16x32xf32>
    %260 = vector.extract_strided_slice %250 {offsets = [0, 32], sizes = [16, 32], strides = [1, 1]} : vector<16x96xf32> to vector<16x32xf32>
    %261 = vector.extract_strided_slice %251 {offsets = [0, 32], sizes = [16, 32], strides = [1, 1]} : vector<16x96xf32> to vector<16x32xf32>
    %262 = arith.addf %260, %261 : vector<16x32xf32>
    %263 = arith.negf %262 : vector<16x32xf32>
    %264 = math.exp %263 : vector<16x32xf32>
    %cst_72 = arith.constant 1.000000e+00 : f32
    %265 = vector.broadcast %cst_72 : f32 to vector<16x32xf32>
    %266 = arith.addf %265, %264 : vector<16x32xf32>
    %267 = arith.divf %265, %266 : vector<16x32xf32>
    %268 = vector.extract_strided_slice %250 {offsets = [0, 64], sizes = [16, 32], strides = [1, 1]} : vector<16x96xf32> to vector<16x32xf32>
    %269 = vector.extract_strided_slice %251 {offsets = [0, 64], sizes = [16, 32], strides = [1, 1]} : vector<16x96xf32> to vector<16x32xf32>
    %270 = vector.broadcast %80 : vector<1x32xf32> to vector<16x32xf32>
    %271 = arith.addf %269, %270 : vector<16x32xf32>
    %272 = arith.mulf %259, %271 : vector<16x32xf32>
    %273 = arith.addf %268, %272 : vector<16x32xf32>
    %274 = math.tanh %273 : vector<16x32xf32>
    %275 = arith.subf %249, %274 : vector<16x32xf32>
    %276 = arith.mulf %267, %275 : vector<16x32xf32>
    %277 = arith.addf %274, %276 : vector<16x32xf32>
    %278 = vector.extract_strided_slice %78 {offsets = [112, 0], sizes = [16, 96], strides = [1, 1]} : vector<128x96xf32> to vector<16x96xf32>
    %cst_73 = arith.constant dense<0.000000e+00> : vector<16x96xf32>
    %279 = tpu.matmul %277, %79, %cst_73 {dimension_numbers = #tpu.dot_dimension_numbers<[1], [0], [0], [1], [0, 0, 1, 1], [], []>} : vector<16x32xf32>, vector<32x96xf32>, vector<16x96xf32> -> vector<16x96xf32>
    %280 = vector.extract_strided_slice %278 {offsets = [0, 0], sizes = [16, 32], strides = [1, 1]} : vector<16x96xf32> to vector<16x32xf32>
    %281 = vector.extract_strided_slice %279 {offsets = [0, 0], sizes = [16, 32], strides = [1, 1]} : vector<16x96xf32> to vector<16x32xf32>
    %282 = arith.addf %280, %281 : vector<16x32xf32>
    %283 = arith.negf %282 : vector<16x32xf32>
    %284 = math.exp %283 : vector<16x32xf32>
    %cst_74 = arith.constant 1.000000e+00 : f32
    %285 = vector.broadcast %cst_74 : f32 to vector<16x32xf32>
    %286 = arith.addf %285, %284 : vector<16x32xf32>
    %287 = arith.divf %285, %286 : vector<16x32xf32>
    %288 = vector.extract_strided_slice %278 {offsets = [0, 32], sizes = [16, 32], strides = [1, 1]} : vector<16x96xf32> to vector<16x32xf32>
    %289 = vector.extract_strided_slice %279 {offsets = [0, 32], sizes = [16, 32], strides = [1, 1]} : vector<16x96xf32> to vector<16x32xf32>
    %290 = arith.addf %288, %289 : vector<16x32xf32>
    %291 = arith.negf %290 : vector<16x32xf32>
    %292 = math.exp %291 : vector<16x32xf32>
    %cst_75 = arith.constant 1.000000e+00 : f32
    %293 = vector.broadcast %cst_75 : f32 to vector<16x32xf32>
    %294 = arith.addf %293, %292 : vector<16x32xf32>
    %295 = arith.divf %293, %294 : vector<16x32xf32>
    %296 = vector.extract_strided_slice %278 {offsets = [0, 64], sizes = [16, 32], strides = [1, 1]} : vector<16x96xf32> to vector<16x32xf32>
    %297 = vector.extract_strided_slice %279 {offsets = [0, 64], sizes = [16, 32], strides = [1, 1]} : vector<16x96xf32> to vector<16x32xf32>
    %298 = vector.broadcast %80 : vector<1x32xf32> to vector<16x32xf32>
    %299 = arith.addf %297, %298 : vector<16x32xf32>
    %300 = arith.mulf %287, %299 : vector<16x32xf32>
    %301 = arith.addf %296, %300 : vector<16x32xf32>
    %302 = math.tanh %301 : vector<16x32xf32>
    %303 = arith.subf %277, %302 : vector<16x32xf32>
    %304 = arith.mulf %295, %303 : vector<16x32xf32>
    %305 = arith.addf %302, %304 : vector<16x32xf32>
    %306 = vector.extract_strided_slice %73 {offsets = [112, 0], sizes = [16, 32], strides = [1, 1]} : vector<128x32xf32> to vector<16x32xf32>
    %307 = arith.addf %305, %306 : vector<16x32xf32>
    %c0_76 = arith.constant 0 : index
    %c0_77 = arith.constant 0 : index
    %308 = vector.load %arg9[%c0_76, %c0_77] : memref<32x32xf32, #tpu.memory_space<vmem>>, vector<32x32xf32>
    %cst_78 = arith.constant dense<0.000000e+00> : vector<16x32xf32>
    %309 = tpu.matmul %307, %308, %cst_78 {dimension_numbers = #tpu.dot_dimension_numbers<[1], [0], [0], [1], [0, 0, 1, 1], [], []>} : vector<16x32xf32>, vector<32x32xf32>, vector<16x32xf32> -> vector<16x32xf32>
    %c0_79 = arith.constant 0 : index
    %c0_80 = arith.constant 0 : index
    %310 = vector.load %arg10[%c0_79, %c0_80] : memref<1x32xf32, #tpu.memory_space<vmem>>, vector<1x32xf32>
    %311 = vector.broadcast %310 : vector<1x32xf32> to vector<16x32xf32>
    %312 = arith.addf %309, %311 : vector<16x32xf32>
    %cst_81 = arith.constant 0.000000e+00 : f32
    %313 = vector.broadcast %cst_81 : f32 to vector<16x32xf32>
    %314 = arith.maximumf %312, %313 : vector<16x32xf32>
    %c0_82 = arith.constant 0 : index
    %c0_83 = arith.constant 0 : index
    %315 = vector.load %arg11[%c0_82, %c0_83] : memref<32x4xf32, #tpu.memory_space<vmem>>, vector<32x4xf32>
    %cst_84 = arith.constant dense<0.000000e+00> : vector<16x4xf32>
    %316 = tpu.matmul %314, %315, %cst_84 {dimension_numbers = #tpu.dot_dimension_numbers<[1], [0], [0], [1], [0, 0, 1, 1], [], []>} : vector<16x32xf32>, vector<32x4xf32>, vector<16x4xf32> -> vector<16x4xf32>
    %c0_85 = arith.constant 0 : index
    %c0_86 = arith.constant 0 : index
    %317 = vector.load %arg12[%c0_85, %c0_86] : memref<1x4xf32, #tpu.memory_space<vmem>>, vector<1x4xf32>
    %318 = vector.broadcast %317 : vector<1x4xf32> to vector<16x4xf32>
    %319 = arith.addf %316, %318 : vector<16x4xf32>
    %320 = vector.extract_strided_slice %319 {offsets = [0, 0], sizes = [9, 4], strides = [1, 1]} : vector<16x4xf32> to vector<9x4xf32>
    %c0_87 = arith.constant 0 : index
    %c0_88 = arith.constant 0 : index
    %321 = vector.load %arg13[%c0_87, %c0_88] : memref<9x4xf32, #tpu.memory_space<vmem>>, vector<9x4xf32>
    tpu.vector_store %arg13[%c0_87, %c0_88], %320 {strides = array<i32>} : memref<9x4xf32, #tpu.memory_space<vmem>>, vector<9x4xf32>,
    return
  }
}

</mosaic_0001>

<llo_original>
// kernel: net_forward.1
$region0: #{net_forward.1}
  #allocation0 [shape = 'u32[]', space=smem, size = 0x4, offset = 0x4, fixed_abs, tag = 'smem constant byte address 0x4 - core index']
  #allocation1 [shape = 'u32[72,128]{1,0:T(1,128)}', space=vmem, size = 0x9000, scoped, tag = 'internal scratch']
  #allocation2 [shape = 'f32[128,8]{1,0:T(8,128)}', space=vmem, size = 0x10000, scoped, tag = 'scratch operand']
  #allocation3 [shape = 'f32[1]{0:T(128)S(6)}', space=smem, size = 0x200, scoped, tag = 'scoped memory for net_forward.1']
  %s0 = inlined_call_operand.vmem [shape: f32[9,2,14], index: 0, kind: input, shape index: {}]
  %s1 = inlined_call_operand.vmem [shape: f32[9], index: 1, kind: input, shape index: {}]
  %s2 = inlined_call_operand.<no memory space> [shape: f32[1], index: 2, kind: input, shape index: {}]
  %s3 = inlined_call_operand.vmem [shape: f32[8,32], index: 3, kind: input, shape index: {}]
  %s4 = inlined_call_operand.vmem [shape: f32[1,32], index: 4, kind: input, shape index: {}]
  %s5 = inlined_call_operand.vmem [shape: f32[32,96], index: 5, kind: input, shape index: {}]
  %s6 = inlined_call_operand.vmem [shape: f32[1,96], index: 6, kind: input, shape index: {}]
  %s7 = inlined_call_operand.vmem [shape: f32[32,96], index: 7, kind: input, shape index: {}]
  %s8 = inlined_call_operand.vmem [shape: f32[1,32], index: 8, kind: input, shape index: {}]
  %s9 = inlined_call_operand.vmem [shape: f32[32,32], index: 9, kind: input, shape index: {}]
  %s10 = inlined_call_operand.vmem [shape: f32[1,32], index: 10, kind: input, shape index: {}]
  %s11 = inlined_call_operand.vmem [shape: f32[32,4], index: 11, kind: input, shape index: {}]
  %s12 = inlined_call_operand.vmem [shape: f32[1,4], index: 12, kind: input, shape index: {}]
  %s13 = inlined_call_operand.vmem [shape: f32[9,4], index: 13, kind: output, shape index: {}]
  %s14 = sld [smem:[#allocation0]]
  $region66: #{net_forward.1} parent=0
    _
  %s16 = ssub.s32 1, %s14
  %s17 = scalar_select 0, %s16, %s14
  %18 = sst [smem:[#allocation3]] %s2
  $region1: #{net_forward.1} parent=0
    #allocation4 [shape = 'u8[512]{0}', space=smem, size = 0x200, scoped, tag = 'input window, operand 1, single buffered']
    #allocation5 [shape = 's32[1]{0}', space=sflag, size = 0x4, scoped, tag = 'scoped memory for net_forward.1']
    %19 = vsyncpa [#allocation5], 0
    // Predicated region
    $region2: #{net_forward.1} parent=1 // pred_check
      _
    $region3: #{net_forward.1} parent=1 // pred_check_branch
      %21 = sbr.rel (0) target = $region5
    $region4: #{net_forward.1} parent=1 // pred_region
      _
    $region5: #{net_forward.1} parent=1 // pred_fallthru
      _
    // Predicated region
    $region6: #{net_forward.1} parent=1 // pred_check
      _
    $region7: #{net_forward.1} parent=1 // pred_check_branch
      %23 = sbr.rel (0) target = $region9
    $region8: #{net_forward.1} parent=1 // pred_region
      %25 = vsyncadd [#allocation5], 0
      %s27 = sshll.u32 %s1, 4
      %s28 = int_to_ptr.vmem [resolvable:$true] %s27
      %30 = dma.vmem_to_smem %s28, 16, [#allocation4], [#allocation5]
    $region9: #{net_forward.1} parent=1 // pred_fallthru
      _
    // Predicated region
    $region10: #{net_forward.1} parent=1 // pred_check
      _
    $region11: #{net_forward.1} parent=1 // pred_check_branch
      %32 = sbr.rel (0) target = $region13
    $region12: #{net_forward.1} parent=1 // pred_region
      _
    $region13: #{net_forward.1} parent=1 // pred_fallthru
      _
    // Predicated region
    $region14: #{net_forward.1} parent=1 // pred_check
      _
    $region15: #{net_forward.1} parent=1 // pred_check_branch
      %34 = sbr.rel (0) target = $region17
    $region16: #{net_forward.1} parent=1 // pred_region
      _
    $region17: #{net_forward.1} parent=1 // pred_fallthru
      _
    // Predicated region
    $region18: #{net_forward.1} parent=1 // pred_check
      _
    $region19: #{net_forward.1} parent=1 // pred_check_branch
      %36 = sbr.rel (0) target = $region21
    $region20: #{net_forward.1} parent=1 // pred_region
      _
    $region21: #{net_forward.1} parent=1 // pred_fallthru
      _
    // Predicated region
    $region22: #{net_forward.1} parent=1 // pred_check
      _
    $region23: #{net_forward.1} parent=1 // pred_check_branch
      %38 = sbr.rel (0) target = $region25
    $region24: #{net_forward.1} parent=1 // pred_region
      _
    $region25: #{net_forward.1} parent=1 // pred_fallthru
      _
    // Predicated region
    $region26: #{net_forward.1} parent=1 // pred_check
      _
    $region27: #{net_forward.1} parent=1 // pred_check_branch
      %40 = sbr.rel (0) target = $region29
    $region28: #{net_forward.1} parent=1 // pred_region
      _
    $region29: #{net_forward.1} parent=1 // pred_fallthru
      _
    // Predicated region
    $region30: #{net_forward.1} parent=1 // pred_check
      _
    $region31: #{net_forward.1} parent=1 // pred_check_branch
      %42 = sbr.rel (0) target = $region33
    $region32: #{net_forward.1} parent=1 // pred_region
      _
    $region33: #{net_forward.1} parent=1 // pred_fallthru
      _
    // Predicated region
    $region34: #{net_forward.1} parent=1 // pred_check
      _
    $region35: #{net_forward.1} parent=1 // pred_check_branch
      %44 = sbr.rel (0) target = $region37
    $region36: #{net_forward.1} parent=1 // pred_region
      _
    $region37: #{net_forward.1} parent=1 // pred_fallthru
      _
    // Predicated region
    $region38: #{net_forward.1} parent=1 // pred_check
      _
    $region39: #{net_forward.1} parent=1 // pred_check_branch
      %46 = sbr.rel (0) target = $region41
    $region40: #{net_forward.1} parent=1 // pred_region
      _
    $region41: #{net_forward.1} parent=1 // pred_fallthru
      _
    // Predicated region
    $region42: #{net_forward.1} parent=1 // pred_check
      _
    $region43: #{net_forward.1} parent=1 // pred_check_branch
      %48 = sbr.rel (0) target = $region45
    $region44: #{net_forward.1} parent=1 // pred_region
      _
    $region45: #{net_forward.1} parent=1 // pred_fallthru
      _
    // Predicated region
    $region46: #{net_forward.1} parent=1 // pred_check
      _
    $region47: #{net_forward.1} parent=1 // pred_check_branch
      %50 = sbr.rel (0) target = $region49
    $region48: #{net_forward.1} parent=1 // pred_region
      _
    $region49: #{net_forward.1} parent=1 // pred_fallthru
      _
    // Predicated region
    $region50: #{net_forward.1} parent=1 // pred_check
      _
    $region51: #{net_forward.1} parent=1 // pred_check_branch
      %52 = sbr.rel (0) target = $region53
    $region52: #{net_forward.1} parent=1 // pred_region
      _
    $region53: #{net_forward.1} parent=1 // pred_fallthru
      _
    // Predicated region
    $region54: #{net_forward.1} parent=1 // pred_check
      _
    $region55: #{net_forward.1} parent=1 // pred_check_branch
      %54 = sbr.rel (0) target = $region57
    $region56: #{net_forward.1} parent=1 // pred_region
      %56 = dma.done [#allocation5], 16
    $region57: #{net_forward.1} parent=1 // pred_fallthru
      _
    %57 = sfence
    %s58 = sld [smem:[#allocation3]]
    %v59 = vld [vmem:[%s0] sm:$0x3]
    %s60 = sld [smem:[#allocation4]]
    %v61 = vstv %s60
    %v62 = vmul.f32 %v59, %v61
    %v63 = vstv %s58
    %v64 = vadd.f32 %v63, %v62
    %s65 = scalar_lea.vmem %s0, 2
    %v66 = vld [vmem:[%s65] sm:$0x3]
    %s67 = sld [smem:[#allocation4 + $0x1]]
    %v68 = vstv %s67
    %v69 = vmul.f32 %v66, %v68
    %v70 = vadd.f32 %v64, %v69
    %s71 = scalar_lea.vmem %s0, 4
    %v72 = vld [vmem:[%s71] sm:$0x3]
    %s73 = sld [smem:[#allocation4 + $0x2]]
    %v74 = vstv %s73
    %v75 = vmul.f32 %v72, %v74
    %v76 = vadd.f32 %v70, %v75
    %s77 = scalar_lea.vmem %s0, 6
    %v78 = vld [vmem:[%s77] sm:$0x3]
    %s79 = sld [smem:[#allocation4 + $0x3]]
    %v80 = vstv %s79
    %v81 = vmul.f32 %v78, %v80
    %v82 = vadd.f32 %v76, %v81
    %s83 = scalar_lea.vmem %s0, 8
    %v84 = vld [vmem:[%s83] sm:$0x3]
    %s85 = sld [smem:[#allocation4 + $0x4]]
    %v86 = vstv %s85
    %v87 = vmul.f32 %v84, %v86
    %v88 = vadd.f32 %v82, %v87
    %s89 = scalar_lea.vmem %s0, 10
    %v90 = vld [vmem:[%s89] sm:$0x3]
    %s91 = sld [smem:[#allocation4 + $0x5]]
    %v92 = vstv %s91
    %v93 = vmul.f32 %v90, %v92
    %v94 = vadd.f32 %v88, %v93
    %s95 = scalar_lea.vmem %s0, 12
    %v96 = vld [vmem:[%s95] sm:$0x3]
    %s97 = sld [smem:[#allocation4 + $0x6]]
    %v98 = vstv %s97
    %v99 = vmul.f32 %v96, %v98
    %v100 = vadd.f32 %v94, %v99
    %s101 = scalar_lea.vmem %s0, 14
    %v102 = vld [vmem:[%s101] sm:$0x3]
    %s103 = sld [smem:[#allocation4 + $0x7]]
    %v104 = vstv %s103
    %v105 = vmul.f32 %v102, %v104
    %v106 = vadd.f32 %v100, %v105
    %s107 = scalar_lea.vmem %s0, 16
    %v108 = vld [vmem:[%s107] sm:$0x3]
    %s109 = sld [smem:[#allocation4 + $0x8]]
    %v110 = vstv %s109
    %v111 = vmul.f32 %v108, %v110
    %v112 = vadd.f32 %v106, %v111
    %vm113 = vcmask 64512
    %114 = vst.msk [vmem:[#allocation2] sm:$0xff] %vm113, 0.0
    %115 = vst.msk [vmem:[#allocation2 + $0x8] sm:$0xff] %vm113, 0.0
    %116 = vst.msk [vmem:[#allocation2 + $0x10] sm:$0xff] %vm113, 0.0
    %117 = vst.msk [vmem:[#allocation2 + $0x18] sm:$0xff] %vm113, 0.0
    %118 = vst.msk [vmem:[#allocation2 + $0x20] sm:$0xff] %vm113, 0.0
    %119 = vst.msk [vmem:[#allocation2 + $0x28] sm:$0xff] %vm113, 0.0
    %120 = vst.msk [vmem:[#allocation2 + $0x30] sm:$0xff] %vm113, 0.0
    %121 = vst.msk [vmem:[#allocation2 + $0x38] sm:$0xff] %vm113, 0.0
    %122 = vst.msk [vmem:[#allocation2 + $0x40] sm:$0xff] %vm113, 0.0
    %123 = vst.msk [vmem:[#allocation2 + $0x48] sm:$0xff] %vm113, 0.0
    %124 = vst.msk [vmem:[#allocation2 + $0x50] sm:$0xff] %vm113, 0.0
    %125 = vst.msk [vmem:[#allocation2 + $0x58] sm:$0xff] %vm113, 0.0
    %126 = vst.msk [vmem:[#allocation2 + $0x60] sm:$0xff] %vm113, 0.0
    %127 = vst.msk [vmem:[#allocation2 + $0x68] sm:$0xff] %vm113, 0.0
    %128 = vst.msk [vmem:[#allocation2 + $0x70] sm:$0xff] %vm113, 0.0
    %129 = vst.msk [vmem:[#allocation2 + $0x78] sm:$0xff] %vm113, 0.0
    %131 = vrot.lane.b32.xlu0 %v112, 1
    %v132 = vpop.permute.xlu0 %131
    %vm134 = vcmask 57352
    %135 = vst.msk [vmem:[#allocation2 + $0x12] sm:$0x1] %vm134, %v132
    %136 = vrot.lane.b32.xlu0 %v112, 121
    %v137 = vpop.permute.xlu0 %136
    %vm139 = vcmask 49152
    %140 = vst.msk [vmem:[#allocation2 + $0x22] sm:$0x1] %vm139, %v137
    %vm141 = vcmask 58377
    %142 = vst.msk [vmem:[#allocation2 + $0x55] sm:$0x2] %vm141, %v132
    %vm143 = vcmask 50177
    %144 = vst.msk [vmem:[#allocation2 + $0x65] sm:$0x2] %vm143, %v137
    %v145 = vld [vmem:[#allocation2] sm:$0xff]
    %v146 = vld [vmem:[#allocation2 + $0x8] sm:$0xff]
    %v147 = vld [vmem:[#allocation2 + $0x10] sm:$0xff]
    %v148 = vld [vmem:[#allocation2 + $0x18] sm:$0xff]
    %v149 = vld [vmem:[#allocation2 + $0x20] sm:$0xff]
    %v150 = vld [vmem:[#allocation2 + $0x28] sm:$0xff]
    %v151 = vld [vmem:[#allocation2 + $0x30] sm:$0xff]
    %v152 = vld [vmem:[#allocation2 + $0x38] sm:$0xff]
    %v153 = vld [vmem:[#allocation2 + $0x40] sm:$0xff]
    %v154 = vld [vmem:[#allocation2 + $0x48] sm:$0xff]
    %v155 = vld [vmem:[#allocation2 + $0x50] sm:$0xff]
    %v156 = vld [vmem:[#allocation2 + $0x58] sm:$0xff]
    %v157 = vld [vmem:[#allocation2 + $0x60] sm:$0xff]
    %v158 = vld [vmem:[#allocation2 + $0x68] sm:$0xff]
    %v159 = vld [vmem:[#allocation2 + $0x70] sm:$0xff]
    %v160 = vld [vmem:[#allocation2 + $0x78] sm:$0xff]
    %v161 = vld [vmem:[%s3] sm:$0xff]
    %v162 = vld [vmem:[%s4] sm:$0x1]
    %v164 = vperm.slane %v162, 0
    %v167 = vsel %vm113, %v145, 0
    %v170 = vsel %vm113, %v146, 0
    %v173 = vsel %vm113, %v147, 0
    %v176 = vsel %vm113, %v148, 0
    %v179 = vsel %vm113, %v149, 0
    %v182 = vsel %vm113, %v150, 0
    %v185 = vsel %vm113, %v151, 0
    %v188 = vsel %vm113, %v152, 0
    %v191 = vsel %vm113, %v153, 0
    %v194 = vsel %vm113, %v154, 0
    %v197 = vsel %vm113, %v155, 0
    %v200 = vsel %vm113, %v156, 0
    %v203 = vsel %vm113, %v157, 0
    %v206 = vsel %vm113, %v158, 0
    %v209 = vsel %vm113, %v159, 0
    %v212 = vsel %vm113, %v160, 0
    %214 = vmatpush.msra.mxu0 0.0
    %215 = vmatpush.msra.mxu0 0.0
    %216 = vmatpush.msra.mxu0 0.0
    %217 = vmatpush.msra.mxu0 0.0
    %218 = vmatpush.msra.mxu0 0.0
    %219 = vmatpush.msra.mxu0 0.0
    %220 = vmatpush.msra.mxu0 0.0
    %221 = vmatpush.msra.mxu0 0.0
    %222 = vmatpush.msra.mxu0 0.0
    %223 = vmatpush.msra.mxu0 0.0
    %224 = vmatpush.msra.mxu0 0.0
    %225 = vmatpush.msra.mxu0 0.0
    %226 = vmatpush.msra.mxu0 0.0
    %227 = vmatpush.msra.mxu0 0.0
    %228 = vmatpush.msra.mxu0 0.0
    %229 = vmatpush.msra.mxu0 %v161
    %230 = vmatmul.f32.gmra.mxu0 %v167
    %v231 = vpop.f32.mrf.mxu0
    %v232 = vadd.f32 %v164, %v231
    %233 = vmatmul.f32.gmra.mxu0 %v170
    %v234 = vpop.f32.mrf.mxu0
    %v235 = vadd.f32 %v164, %v234
    %236 = vmatmul.f32.gmra.mxu0 %v173
    %v237 = vpop.f32.mrf.mxu0
    %v238 = vadd.f32 %v164, %v237
    %239 = vmatmul.f32.gmra.mxu0 %v176
    %v240 = vpop.f32.mrf.mxu0
    %v241 = vadd.f32 %v164, %v240
    %242 = vmatmul.f32.gmra.mxu0 %v179
    %v243 = vpop.f32.mrf.mxu0
    %v244 = vadd.f32 %v164, %v243
    %245 = vmatmul.f32.gmra.mxu0 %v182
    %v246 = vpop.f32.mrf.mxu0
    %v247 = vadd.f32 %v164, %v246
    %248 = vmatmul.f32.gmra.mxu0 %v185
    %v249 = vpop.f32.mrf.mxu0
    %v250 = vadd.f32 %v164, %v249
    %251 = vmatmul.f32.gmra.mxu0 %v188
    %v252 = vpop.f32.mrf.mxu0
    %v253 = vadd.f32 %v164, %v252
    %254 = vmatmul.f32.gmra.mxu0 %v191
    %v255 = vpop.f32.mrf.mxu0
    %v256 = vadd.f32 %v164, %v255
    %257 = vmatmul.f32.gmra.mxu0 %v194
    %v258 = vpop.f32.mrf.mxu0
    %v259 = vadd.f32 %v164, %v258
    %260 = vmatmul.f32.gmra.mxu0 %v197
    %v261 = vpop.f32.mrf.mxu0
    %v262 = vadd.f32 %v164, %v261
    %263 = vmatmul.f32.gmra.mxu0 %v200
    %v264 = vpop.f32.mrf.mxu0
    %v265 = vadd.f32 %v164, %v264
    %266 = vmatmul.f32.gmra.mxu0 %v203
    %v267 = vpop.f32.mrf.mxu0
    %v268 = vadd.f32 %v164, %v267
    %269 = vmatmul.f32.gmra.mxu0 %v206
    %v270 = vpop.f32.mrf.mxu0
    %v271 = vadd.f32 %v164, %v270
    %272 = vmatmul.f32.gmra.mxu0 %v209
    %v273 = vpop.f32.mrf.mxu0
    %v274 = vadd.f32 %v164, %v273
    %275 = vmatmul.f32.gmra.mxu0 %v212
    %v276 = vpop.f32.mrf.mxu0
    %v277 = vadd.f32 %v164, %v276
    %278 = vdwg.mxu0
    %v279 = vmax.f32 %v232, 0.0
    %v280 = vmax.f32 %v235, 0.0
    %v281 = vmax.f32 %v238, 0.0
    %v282 = vmax.f32 %v241, 0.0
    %v283 = vmax.f32 %v244, 0.0
    %v284 = vmax.f32 %v247, 0.0
    %v285 = vmax.f32 %v250, 0.0
    %v286 = vmax.f32 %v253, 0.0
    %v287 = vmax.f32 %v256, 0.0
    %v288 = vmax.f32 %v259, 0.0
    %v289 = vmax.f32 %v262, 0.0
    %v290 = vmax.f32 %v265, 0.0
    %v291 = vmax.f32 %v268, 0.0
    %v292 = vmax.f32 %v271, 0.0
    %v293 = vmax.f32 %v274, 0.0
    %v294 = vmax.f32 %v277, 0.0
    %v295 = vld [vmem:[%s5] sm:$0xff]
    %v296 = vld [vmem:[%s5 + $0x8] sm:$0xff]
    %v297 = vld [vmem:[%s5 + $0x10] sm:$0xff]
    %v298 = vld [vmem:[%s5 + $0x18] sm:$0xff]
    %v299 = vld [vmem:[%s6] sm:$0x1]
    %v301 = vperm.slane %v299, 0
    %vm303 = vcmask 261120
    %v305 = vsel %vm303, %v279, 0
    %v308 = vsel %vm303, %v280, 0
    %v311 = vsel %vm303, %v281, 0
    %v314 = vsel %vm303, %v282, 0
    %v317 = vsel %vm303, %v283, 0
    %v320 = vsel %vm303, %v284, 0
    %v323 = vsel %vm303, %v285, 0
    %v326 = vsel %vm303, %v286, 0
    %v329 = vsel %vm303, %v287, 0
    %v332 = vsel %vm303, %v288, 0
    %v335 = vsel %vm303, %v289, 0
    %v338 = vsel %vm303, %v290, 0
    %v341 = vsel %vm303, %v291, 0
    %v344 = vsel %vm303, %v292, 0
    %v347 = vsel %vm303, %v293, 0
    %v350 = vsel %vm303, %v294, 0
    %352 = vmatpush.msra.mxu0 0.0
    %353 = vmatpush.msra.mxu0 0.0
    %354 = vmatpush.msra.mxu0 0.0
    %355 = vmatpush.msra.mxu0 0.0
    %356 = vmatpush.msra.mxu0 0.0
    %357 = vmatpush.msra.mxu0 0.0
    %358 = vmatpush.msra.mxu0 0.0
    %359 = vmatpush.msra.mxu0 0.0
    %360 = vmatpush.msra.mxu0 0.0
    %361 = vmatpush.msra.mxu0 0.0
    %362 = vmatpush.msra.mxu0 0.0
    %363 = vmatpush.msra.mxu0 0.0
    %364 = vmatpush.msra.mxu0 %v298
    %365 = vmatpush.msra.mxu0 %v297
    %366 = vmatpush.msra.mxu0 %v296
    %367 = vmatpush.msra.mxu0 %v295
    %368 = vmatmul.f32.gmra.mxu0 %v305
    %v369 = vpop.f32.mrf.mxu0
    %v370 = vadd.f32 %v301, %v369
    %371 = vmatmul.f32.gmra.mxu0 %v308
    %v372 = vpop.f32.mrf.mxu0
    %v373 = vadd.f32 %v301, %v372
    %374 = vmatmul.f32.gmra.mxu0 %v311
    %v375 = vpop.f32.mrf.mxu0
    %v376 = vadd.f32 %v301, %v375
    %377 = vmatmul.f32.gmra.mxu0 %v314
    %v378 = vpop.f32.mrf.mxu0
    %v379 = vadd.f32 %v301, %v378
    %380 = vmatmul.f32.gmra.mxu0 %v317
    %v381 = vpop.f32.mrf.mxu0
    %v382 = vadd.f32 %v301, %v381
    %383 = vmatmul.f32.gmra.mxu0 %v320
    %v384 = vpop.f32.mrf.mxu0
    %v385 = vadd.f32 %v301, %v384
    %386 = vmatmul.f32.gmra.mxu0 %v323
    %v387 = vpop.f32.mrf.mxu0
    %v388 = vadd.f32 %v301, %v387
    %389 = vmatmul.f32.gmra.mxu0 %v326
    %v390 = vpop.f32.mrf.mxu0
    %v391 = vadd.f32 %v301, %v390
    %392 = vmatmul.f32.gmra.mxu0 %v329
    %v393 = vpop.f32.mrf.mxu0
    %v394 = vadd.f32 %v301, %v393
    %395 = vmatmul.f32.gmra.mxu0 %v332
    %v396 = vpop.f32.mrf.mxu0
    %v397 = vadd.f32 %v301, %v396
    %398 = vmatmul.f32.gmra.mxu0 %v335
    %v399 = vpop.f32.mrf.mxu0
    %v400 = vadd.f32 %v301, %v399
    %401 = vmatmul.f32.gmra.mxu0 %v338
    %v402 = vpop.f32.mrf.mxu0
    %v403 = vadd.f32 %v301, %v402
    %404 = vmatmul.f32.gmra.mxu0 %v341
    %v405 = vpop.f32.mrf.mxu0
    %v406 = vadd.f32 %v301, %v405
    %407 = vmatmul.f32.gmra.mxu0 %v344
    %v408 = vpop.f32.mrf.mxu0
    %v409 = vadd.f32 %v301, %v408
    %410 = vmatmul.f32.gmra.mxu0 %v347
    %v411 = vpop.f32.mrf.mxu0
    %v412 = vadd.f32 %v301, %v411
    %413 = vmatmul.f32.gmra.mxu0 %v350
    %v414 = vpop.f32.mrf.mxu0
    %v415 = vadd.f32 %v301, %v414
    %416 = vdwg.mxu0
    %v417 = vld [vmem:[%s7] sm:$0xff]
    %v418 = vld [vmem:[%s7 + $0x8] sm:$0xff]
    %v419 = vld [vmem:[%s7 + $0x10] sm:$0xff]
    %v420 = vld [vmem:[%s7 + $0x18] sm:$0xff]
    %v421 = vld [vmem:[%s8] sm:$0x1]
    %v423 = vsel %vm303, 0.0, 0
    %425 = vmatpush.msra.mxu0 0.0
    %426 = vmatpush.msra.mxu0 0.0
    %427 = vmatpush.msra.mxu0 0.0
    %428 = vmatpush.msra.mxu0 0.0
    %429 = vmatpush.msra.mxu0 0.0
    %430 = vmatpush.msra.mxu0 0.0
    %431 = vmatpush.msra.mxu0 0.0
    %432 = vmatpush.msra.mxu0 0.0
    %433 = vmatpush.msra.mxu0 0.0
    %434 = vmatpush.msra.mxu0 0.0
    %435 = vmatpush.msra.mxu0 0.0
    %436 = vmatpush.msra.mxu0 0.0
    %437 = vmatpush.msra.mxu0 %v420
    %438 = vmatpush.msra.mxu0 %v419
    %439 = vmatpush.msra.mxu0 %v418
    %440 = vmatpush.msra.mxu0 %v417
    %441 = vmatmul.f32.gmra.mxu0 %v423
    %v442 = vpop.f32.mrf.mxu0
    %v443 = vadd.f32 0.0, %v442
    %444 = vmatmul.f32.gmra.mxu0 %v423
    %v445 = vpop.f32.mrf.mxu0
    %v446 = vadd.f32 0.0, %v445
    %447 = vdwg.mxu0
    %v448 = vadd.f32 %v370, %v443
    %v449 = vadd.f32 %v373, %v446
    %v450 = vxor.u32 %v448, 2147483648
    %v451 = vxor.u32 %v449, 2147483648
    %v452 = vmul.f32 %v450, 1.442695
    %v453 = vpow.pop %v452
    %v454 = vmul.f32 %v451, 1.442695
    %v455 = vpow.pop %v454
    %v456 = vadd.f32 %v453, 1.0
    %v457 = vadd.f32 %v455, 1.0
    %v458 = vrcp.pop %v456
    %v459 = vmul.f32 %v456, %v458
    %v460 = vsub.f32 1.0, %v459
    %v461 = vmul.f32 %v458, %v460
    %v462 = vadd.f32 %v458, %v461
    %vm463 = vweird.f32 %v456
    %vm464 = vweird.f32 %v458
    %vm465 = vmor %vm463, %vm464
    %v466 = vsel %vm465, %v458, %v462
    %v467 = vand.u32 2147483647, %v456
    %vm468 = vcmp.eq.f32.partialorder %v467, 8.507059e+37
    %v469 = vand.u32 %v456, 2147483648
    %v470 = vor.u32 1.1754944e-38, %v469
    %v471 = vsel %vm468, %v470, %v466
    %v472 = vmul.f32 1.0, %v471
    %v473 = vrcp.pop %v457
    %v474 = vmul.f32 %v457, %v473
    %v475 = vsub.f32 1.0, %v474
    %v476 = vmul.f32 %v473, %v475
    %v477 = vadd.f32 %v473, %v476
    %vm478 = vweird.f32 %v457
    %vm479 = vweird.f32 %v473
    %vm480 = vmor %vm478, %vm479
    %v481 = vsel %vm480, %v473, %v477
    %v482 = vand.u32 2147483647, %v457
    %vm483 = vcmp.eq.f32.partialorder %v482, 8.507059e+37
    %v484 = vand.u32 %v457, 2147483648
    %v485 = vor.u32 1.1754944e-38, %v484
    %v486 = vsel %vm483, %v485, %v481
    %v487 = vmul.f32 1.0, %v486
    %v489 = vperm.slane %v421, 0
    %490 = vrot.lane.b32.xlu0 %v489, 64
    %v491 = vpop.permute.xlu0 %490
    %v493 = vadd.f32 %v443, %v491
    %v494 = vadd.f32 %v446, %v491
    %497 = vrot.lane.b32.xlu0 %v493, 64
    %v498 = vpop.permute.xlu0 %497
    %499 = vrot.lane.b32.xlu0 %v494, 64
    %v500 = vpop.permute.xlu0 %499
    %v503 = vmul.f32 %v472, %v498
    %v504 = vmul.f32 %v487, %v500
    %507 = vrot.lane.b32.xlu0 %v503, 64
    %v508 = vpop.permute.xlu0 %507
    %509 = vrot.lane.b32.xlu0 %v504, 64
    %v510 = vpop.permute.xlu0 %509
    %v513 = vadd.f32 %v370, %v508
    %v514 = vadd.f32 %v373, %v510
    %v515 = vtanh.pop %v513
    %v516 = vtanh.pop %v514
    %v517 = vsub.f32 0.0, %v515
    %v518 = vsub.f32 0.0, %v516
    %521 = vrot.lane.b32.xlu0 %v517, 96
    %v522 = vpop.permute.xlu0 %521
    %523 = vrot.lane.b32.xlu0 %v518, 96
    %v524 = vpop.permute.xlu0 %523
    %v527 = vmul.f32 %v472, %v522
    %v528 = vmul.f32 %v487, %v524
    %531 = vrot.lane.b32.xlu0 %v527, 32
    %v532 = vpop.permute.xlu0 %531
    %533 = vrot.lane.b32.xlu0 %v528, 32
    %v534 = vpop.permute.xlu0 %533
    %v537 = vadd.f32 %v515, %v532
    %v538 = vadd.f32 %v516, %v534
    %541 = vrot.lane.b32.xlu0 %v537, 64
    %v542 = vpop.permute.xlu0 %541
    %543 = vrot.lane.b32.xlu0 %v538, 64
    %v544 = vpop.permute.xlu0 %543
    %v545 = vsel %vm303, %v542, 0
    %v547 = vsel %vm303, %v544, 0
    %549 = vmatpush.msra.mxu0 0.0
    %550 = vmatpush.msra.mxu0 0.0
    %551 = vmatpush.msra.mxu0 0.0
    %552 = vmatpush.msra.mxu0 0.0
    %553 = vmatpush.msra.mxu0 0.0
    %554 = vmatpush.msra.mxu0 0.0
    %555 = vmatpush.msra.mxu0 0.0
    %556 = vmatpush.msra.mxu0 0.0
    %557 = vmatpush.msra.mxu0 0.0
    %558 = vmatpush.msra.mxu0 0.0
    %559 = vmatpush.msra.mxu0 0.0
    %560 = vmatpush.msra.mxu0 0.0
    %561 = vmatpush.msra.mxu0 %v420
    %562 = vmatpush.msra.mxu0 %v419
    %563 = vmatpush.msra.mxu0 %v418
    %564 = vmatpush.msra.mxu0 %v417
    %565 = vmatmul.f32.gmra.mxu0 %v545
    %v566 = vpop.f32.mrf.mxu0
    %v567 = vadd.f32 0.0, %v566
    %568 = vmatmul.f32.gmra.mxu0 %v547
    %v569 = vpop.f32.mrf.mxu0
    %v570 = vadd.f32 0.0, %v569
    %571 = vdwg.mxu0
    %v572 = vadd.f32 %v376, %v567
    %v573 = vadd.f32 %v379, %v570
    %v574 = vxor.u32 %v572, 2147483648
    %v575 = vxor.u32 %v573, 2147483648
    %v576 = vmul.f32 %v574, 1.442695
    %v577 = vpow.pop %v576
    %v578 = vmul.f32 %v575, 1.442695
    %v579 = vpow.pop %v578
    %v580 = vadd.f32 %v577, 1.0
    %v581 = vadd.f32 %v579, 1.0
    %v582 = vrcp.pop %v580
    %v583 = vmul.f32 %v580, %v582
    %v584 = vsub.f32 1.0, %v583
    %v585 = vmul.f32 %v582, %v584
    %v586 = vadd.f32 %v582, %v585
    %vm587 = vweird.f32 %v580
    %vm588 = vweird.f32 %v582
    %vm589 = vmor %vm587, %vm588
    %v590 = vsel %vm589, %v582, %v586
    %v591 = vand.u32 2147483647, %v580
    %vm592 = vcmp.eq.f32.partialorder %v591, 8.507059e+37
    %v593 = vand.u32 %v580, 2147483648
    %v594 = vor.u32 1.1754944e-38, %v593
    %v595 = vsel %vm592, %v594, %v590
    %v596 = vmul.f32 1.0, %v595
    %v597 = vrcp.pop %v581
    %v598 = vmul.f32 %v581, %v597
    %v599 = vsub.f32 1.0, %v598
    %v600 = vmul.f32 %v597, %v599
    %v601 = vadd.f32 %v597, %v600
    %vm602 = vweird.f32 %v581
    %vm603 = vweird.f32 %v597
    %vm604 = vmor %vm602, %vm603
    %v605 = vsel %vm604, %v597, %v601
    %v606 = vand.u32 2147483647, %v581
    %vm607 = vcmp.eq.f32.partialorder %v606, 8.507059e+37
    %v608 = vand.u32 %v581, 2147483648
    %v609 = vor.u32 1.1754944e-38, %v608
    %v610 = vsel %vm607, %v609, %v605
    %v611 = vmul.f32 1.0, %v610
    %v612 = vadd.f32 %v567, %v491
    %v613 = vadd.f32 %v570, %v491
    %616 = vrot.lane.b32.xlu0 %v612, 64
    %v617 = vpop.permute.xlu0 %616
    %618 = vrot.lane.b32.xlu0 %v613, 64
    %v619 = vpop.permute.xlu0 %618
    %v622 = vmul.f32 %v596, %v617
    %v623 = vmul.f32 %v611, %v619
    %626 = vrot.lane.b32.xlu0 %v622, 64
    %v627 = vpop.permute.xlu0 %626
    %628 = vrot.lane.b32.xlu0 %v623, 64
    %v629 = vpop.permute.xlu0 %628
    %v632 = vadd.f32 %v376, %v627
    %v633 = vadd.f32 %v379, %v629
    %v634 = vtanh.pop %v632
    %v635 = vtanh.pop %v633
    %v636 = vsub.f32 %v537, %v634
    %v637 = vsub.f32 %v538, %v635
    %640 = vrot.lane.b32.xlu0 %v636, 96
    %v641 = vpop.permute.xlu0 %640
    %642 = vrot.lane.b32.xlu0 %v637, 96
    %v643 = vpop.permute.xlu0 %642
    %v646 = vmul.f32 %v596, %v641
    %v647 = vmul.f32 %v611, %v643
    %650 = vrot.lane.b32.xlu0 %v646, 32
    %v651 = vpop.permute.xlu0 %650
    %652 = vrot.lane.b32.xlu0 %v647, 32
    %v653 = vpop.permute.xlu0 %652
    %v656 = vadd.f32 %v634, %v651
    %v657 = vadd.f32 %v635, %v653
    %660 = vrot.lane.b32.xlu0 %v656, 64
    %v661 = vpop.permute.xlu0 %660
    %662 = vrot.lane.b32.xlu0 %v657, 64
    %v663 = vpop.permute.xlu0 %662
    %v664 = vsel %vm303, %v661, 0
    %v666 = vsel %vm303, %v663, 0
    %668 = vmatpush.msra.mxu0 0.0
    %669 = vmatpush.msra.mxu0 0.0
    %670 = vmatpush.msra.mxu0 0.0
    %671 = vmatpush.msra.mxu0 0.0
    %672 = vmatpush.msra.mxu0 0.0
    %673 = vmatpush.msra.mxu0 0.0
    %674 = vmatpush.msra.mxu0 0.0
    %675 = vmatpush.msra.mxu0 0.0
    %676 = vmatpush.msra.mxu0 0.0
    %677 = vmatpush.msra.mxu0 0.0
    %678 = vmatpush.msra.mxu0 0.0
    %679 = vmatpush.msra.mxu0 0.0
    %680 = vmatpush.msra.mxu0 %v420
    %681 = vmatpush.msra.mxu0 %v419
    %682 = vmatpush.msra.mxu0 %v418
    %683 = vmatpush.msra.mxu0 %v417
    %684 = vmatmul.f32.gmra.mxu0 %v664
    %v685 = vpop.f32.mrf.mxu0
    %v686 = vadd.f32 0.0, %v685
    %687 = vmatmul.f32.gmra.mxu0 %v666
    %v688 = vpop.f32.mrf.mxu0
    %v689 = vadd.f32 0.0, %v688
    %690 = vdwg.mxu0
    %v691 = vadd.f32 %v382, %v686
    %v692 = vadd.f32 %v385, %v689
    %v693 = vxor.u32 %v691, 2147483648
    %v694 = vxor.u32 %v692, 2147483648
    %v695 = vmul.f32 %v693, 1.442695
    %v696 = vpow.pop %v695
    %v697 = vmul.f32 %v694, 1.442695
    %v698 = vpow.pop %v697
    %v699 = vadd.f32 %v696, 1.0
    %v700 = vadd.f32 %v698, 1.0
    %v701 = vrcp.pop %v699
    %v702 = vmul.f32 %v699, %v701
    %v703 = vsub.f32 1.0, %v702
    %v704 = vmul.f32 %v701, %v703
    %v705 = vadd.f32 %v701, %v704
    %vm706 = vweird.f32 %v699
    %vm707 = vweird.f32 %v701
    %vm708 = vmor %vm706, %vm707
    %v709 = vsel %vm708, %v701, %v705
    %v710 = vand.u32 2147483647, %v699
    %vm711 = vcmp.eq.f32.partialorder %v710, 8.507059e+37
    %v712 = vand.u32 %v699, 2147483648
    %v713 = vor.u32 1.1754944e-38, %v712
    %v714 = vsel %vm711, %v713, %v709
    %v715 = vmul.f32 1.0, %v714
    %v716 = vrcp.pop %v700
    %v717 = vmul.f32 %v700, %v716
    %v718 = vsub.f32 1.0, %v717
    %v719 = vmul.f32 %v716, %v718
    %v720 = vadd.f32 %v716, %v719
    %vm721 = vweird.f32 %v700
    %vm722 = vweird.f32 %v716
    %vm723 = vmor %vm721, %vm722
    %v724 = vsel %vm723, %v716, %v720
    %v725 = vand.u32 2147483647, %v700
    %vm726 = vcmp.eq.f32.partialorder %v725, 8.507059e+37
    %v727 = vand.u32 %v700, 2147483648
    %v728 = vor.u32 1.1754944e-38, %v727
    %v729 = vsel %vm726, %v728, %v724
    %v730 = vmul.f32 1.0, %v729
    %v731 = vadd.f32 %v686, %v491
    %v732 = vadd.f32 %v689, %v491
    %735 = vrot.lane.b32.xlu0 %v731, 64
    %v736 = vpop.permute.xlu0 %735
    %737 = vrot.lane.b32.xlu0 %v732, 64
    %v738 = vpop.permute.xlu0 %737
    %v741 = vmul.f32 %v715, %v736
    %v742 = vmul.f32 %v730, %v738
    %745 = vrot.lane.b32.xlu0 %v741, 64
    %v746 = vpop.permute.xlu0 %745
    %747 = vrot.lane.b32.xlu0 %v742, 64
    %v748 = vpop.permute.xlu0 %747
    %v751 = vadd.f32 %v382, %v746
    %v752 = vadd.f32 %v385, %v748
    %v753 = vtanh.pop %v751
    %v754 = vtanh.pop %v752
    %v755 = vsub.f32 %v656, %v753
    %v756 = vsub.f32 %v657, %v754
    %759 = vrot.lane.b32.xlu0 %v755, 96
    %v760 = vpop.permute.xlu0 %759
    %761 = vrot.lane.b32.xlu0 %v756, 96
    %v762 = vpop.permute.xlu0 %761
    %v765 = vmul.f32 %v715, %v760
    %v766 = vmul.f32 %v730, %v762
    %769 = vrot.lane.b32.xlu0 %v765, 32
    %v770 = vpop.permute.xlu0 %769
    %771 = vrot.lane.b32.xlu0 %v766, 32
    %v772 = vpop.permute.xlu0 %771
    %v775 = vadd.f32 %v753, %v770
    %v776 = vadd.f32 %v754, %v772
    %779 = vrot.lane.b32.xlu0 %v775, 64
    %v780 = vpop.permute.xlu0 %779
    %781 = vrot.lane.b32.xlu0 %v776, 64
    %v782 = vpop.permute.xlu0 %781
    %v783 = vsel %vm303, %v780, 0
    %v785 = vsel %vm303, %v782, 0
    %787 = vmatpush.msra.mxu0 0.0
    %788 = vmatpush.msra.mxu0 0.0
    %789 = vmatpush.msra.mxu0 0.0
    %790 = vmatpush.msra.mxu0 0.0
    %791 = vmatpush.msra.mxu0 0.0
    %792 = vmatpush.msra.mxu0 0.0
    %793 = vmatpush.msra.mxu0 0.0
    %794 = vmatpush.msra.mxu0 0.0
    %795 = vmatpush.msra.mxu0 0.0
    %796 = vmatpush.msra.mxu0 0.0
    %797 = vmatpush.msra.mxu0 0.0
    %798 = vmatpush.msra.mxu0 0.0
    %799 = vmatpush.msra.mxu0 %v420
    %800 = vmatpush.msra.mxu0 %v419
    %801 = vmatpush.msra.mxu0 %v418
    %802 = vmatpush.msra.mxu0 %v417
    %803 = vmatmul.f32.gmra.mxu0 %v783
    %v804 = vpop.f32.mrf.mxu0
    %v805 = vadd.f32 0.0, %v804
    %806 = vmatmul.f32.gmra.mxu0 %v785
    %v807 = vpop.f32.mrf.mxu0
    %v808 = vadd.f32 0.0, %v807
    %809 = vdwg.mxu0
    %v810 = vadd.f32 %v388, %v805
    %v811 = vadd.f32 %v391, %v808
    %v812 = vxor.u32 %v810, 2147483648
    %v813 = vxor.u32 %v811, 2147483648
    %v814 = vmul.f32 %v812, 1.442695
    %v815 = vpow.pop %v814
    %v816 = vmul.f32 %v813, 1.442695
    %v817 = vpow.pop %v816
    %v818 = vadd.f32 %v815, 1.0
    %v819 = vadd.f32 %v817, 1.0
    %v820 = vrcp.pop %v818
    %v821 = vmul.f32 %v818, %v820
    %v822 = vsub.f32 1.0, %v821
    %v823 = vmul.f32 %v820, %v822
    %v824 = vadd.f32 %v820, %v823
    %vm825 = vweird.f32 %v818
    %vm826 = vweird.f32 %v820
    %vm827 = vmor %vm825, %vm826
    %v828 = vsel %vm827, %v820, %v824
    %v829 = vand.u32 2147483647, %v818
    %vm830 = vcmp.eq.f32.partialorder %v829, 8.507059e+37
    %v831 = vand.u32 %v818, 2147483648
    %v832 = vor.u32 1.1754944e-38, %v831
    %v833 = vsel %vm830, %v832, %v828
    %v834 = vmul.f32 1.0, %v833
    %v835 = vrcp.pop %v819
    %v836 = vmul.f32 %v819, %v835
    %v837 = vsub.f32 1.0, %v836
    %v838 = vmul.f32 %v835, %v837
    %v839 = vadd.f32 %v835, %v838
    %vm840 = vweird.f32 %v819
    %vm841 = vweird.f32 %v835
    %vm842 = vmor %vm840, %vm841
    %v843 = vsel %vm842, %v835, %v839
    %v844 = vand.u32 2147483647, %v819
    %vm845 = vcmp.eq.f32.partialorder %v844, 8.507059e+37
    %v846 = vand.u32 %v819, 2147483648
    %v847 = vor.u32 1.1754944e-38, %v846
    %v848 = vsel %vm845, %v847, %v843
    %v849 = vmul.f32 1.0, %v848
    %v850 = vadd.f32 %v805, %v491
    %v851 = vadd.f32 %v808, %v491
    %854 = vrot.lane.b32.xlu0 %v850, 64
    %v855 = vpop.permute.xlu0 %854
    %856 = vrot.lane.b32.xlu0 %v851, 64
    %v857 = vpop.permute.xlu0 %856
    %v860 = vmul.f32 %v834, %v855
    %v861 = vmul.f32 %v849, %v857
    %864 = vrot.lane.b32.xlu0 %v860, 64
    %v865 = vpop.permute.xlu0 %864
    %866 = vrot.lane.b32.xlu0 %v861, 64
    %v867 = vpop.permute.xlu0 %866
    %v870 = vadd.f32 %v388, %v865
    %v871 = vadd.f32 %v391, %v867
    %v872 = vtanh.pop %v870
    %v873 = vtanh.pop %v871
    %v874 = vsub.f32 %v775, %v872
    %v875 = vsub.f32 %v776, %v873
    %878 = vrot.lane.b32.xlu0 %v874, 96
    %v879 = vpop.permute.xlu0 %878
    %880 = vrot.lane.b32.xlu0 %v875, 96
    %v881 = vpop.permute.xlu0 %880
    %v884 = vmul.f32 %v834, %v879
    %v885 = vmul.f32 %v849, %v881
    %888 = vrot.lane.b32.xlu0 %v884, 32
    %v889 = vpop.permute.xlu0 %888
    %890 = vrot.lane.b32.xlu0 %v885, 32
    %v891 = vpop.permute.xlu0 %890
    %v894 = vadd.f32 %v872, %v889
    %v895 = vadd.f32 %v873, %v891
    %898 = vrot.lane.b32.xlu0 %v894, 64
    %v899 = vpop.permute.xlu0 %898
    %900 = vrot.lane.b32.xlu0 %v895, 64
    %v901 = vpop.permute.xlu0 %900
    %v902 = vsel %vm303, %v899, 0
    %v904 = vsel %vm303, %v901, 0
    %906 = vmatpush.msra.mxu0 0.0
    %907 = vmatpush.msra.mxu0 0.0
    %908 = vmatpush.msra.mxu0 0.0
    %909 = vmatpush.msra.mxu0 0.0
    %910 = vmatpush.msra.mxu0 0.0
    %911 = vmatpush.msra.mxu0 0.0
    %912 = vmatpush.msra.mxu0 0.0
    %913 = vmatpush.msra.mxu0 0.0
    %914 = vmatpush.msra.mxu0 0.0
    %915 = vmatpush.msra.mxu0 0.0
    %916 = vmatpush.msra.mxu0 0.0
    %917 = vmatpush.msra.mxu0 0.0
    %918 = vmatpush.msra.mxu0 %v420
    %919 = vmatpush.msra.mxu0 %v419
    %920 = vmatpush.msra.mxu0 %v418
    %921 = vmatpush.msra.mxu0 %v417
    %922 = vmatmul.f32.gmra.mxu0 %v902
    %v923 = vpop.f32.mrf.mxu0
    %v924 = vadd.f32 0.0, %v923
    %925 = vmatmul.f32.gmra.mxu0 %v904
    %v926 = vpop.f32.mrf.mxu0
    %v927 = vadd.f32 0.0, %v926
    %928 = vdwg.mxu0
    %v929 = vadd.f32 %v394, %v924
    %v930 = vadd.f32 %v397, %v927
    %v931 = vxor.u32 %v929, 2147483648
    %v932 = vxor.u32 %v930, 2147483648
    %v933 = vmul.f32 %v931, 1.442695
    %v934 = vpow.pop %v933
    %v935 = vmul.f32 %v932, 1.442695
    %v936 = vpow.pop %v935
    %v937 = vadd.f32 %v934, 1.0
    %v938 = vadd.f32 %v936, 1.0
    %v939 = vrcp.pop %v937
    %v940 = vmul.f32 %v937, %v939
    %v941 = vsub.f32 1.0, %v940
    %v942 = vmul.f32 %v939, %v941
    %v943 = vadd.f32 %v939, %v942
    %vm944 = vweird.f32 %v937
    %vm945 = vweird.f32 %v939
    %vm946 = vmor %vm944, %vm945
    %v947 = vsel %vm946, %v939, %v943
    %v948 = vand.u32 2147483647, %v937
    %vm949 = vcmp.eq.f32.partialorder %v948, 8.507059e+37
    %v950 = vand.u32 %v937, 2147483648
    %v951 = vor.u32 1.1754944e-38, %v950
    %v952 = vsel %vm949, %v951, %v947
    %v953 = vmul.f32 1.0, %v952
    %v954 = vrcp.pop %v938
    %v955 = vmul.f32 %v938, %v954
    %v956 = vsub.f32 1.0, %v955
    %v957 = vmul.f32 %v954, %v956
    %v958 = vadd.f32 %v954, %v957
    %vm959 = vweird.f32 %v938
    %vm960 = vweird.f32 %v954
    %vm961 = vmor %vm959, %vm960
    %v962 = vsel %vm961, %v954, %v958
    %v963 = vand.u32 2147483647, %v938
    %vm964 = vcmp.eq.f32.partialorder %v963, 8.507059e+37
    %v965 = vand.u32 %v938, 2147483648
    %v966 = vor.u32 1.1754944e-38, %v965
    %v967 = vsel %vm964, %v966, %v962
    %v968 = vmul.f32 1.0, %v967
    %v969 = vadd.f32 %v924, %v491
    %v970 = vadd.f32 %v927, %v491
    %973 = vrot.lane.b32.xlu0 %v969, 64
    %v974 = vpop.permute.xlu0 %973
    %975 = vrot.lane.b32.xlu0 %v970, 64
    %v976 = vpop.permute.xlu0 %975
    %v979 = vmul.f32 %v953, %v974
    %v980 = vmul.f32 %v968, %v976
    %983 = vrot.lane.b32.xlu0 %v979, 64
    %v984 = vpop.permute.xlu0 %983
    %985 = vrot.lane.b32.xlu0 %v980, 64
    %v986 = vpop.permute.xlu0 %985
    %v989 = vadd.f32 %v394, %v984
    %v990 = vadd.f32 %v397, %v986
    %v991 = vtanh.pop %v989
    %v992 = vtanh.pop %v990
    %v993 = vsub.f32 %v894, %v991
    %v994 = vsub.f32 %v895, %v992
    %997 = vrot.lane.b32.xlu0 %v993, 96
    %v998 = vpop.permute.xlu0 %997
    %999 = vrot.lane.b32.xlu0 %v994, 96
    %v1000 = vpop.permute.xlu0 %999
    %v1003 = vmul.f32 %v953, %v998
    %v1004 = vmul.f32 %v968, %v1000
    %1007 = vrot.lane.b32.xlu0 %v1003, 32
    %v1008 = vpop.permute.xlu0 %1007
    %1009 = vrot.lane.b32.xlu0 %v1004, 32
    %v1010 = vpop.permute.xlu0 %1009
    %v1013 = vadd.f32 %v991, %v1008
    %v1014 = vadd.f32 %v992, %v1010
    %1017 = vrot.lane.b32.xlu0 %v1013, 64
    %v1018 = vpop.permute.xlu0 %1017
    %1019 = vrot.lane.b32.xlu0 %v1014, 64
    %v1020 = vpop.permute.xlu0 %1019
    %v1021 = vsel %vm303, %v1018, 0
    %v1023 = vsel %vm303, %v1020, 0
    %1025 = vmatpush.msra.mxu0 0.0
    %1026 = vmatpush.msra.mxu0 0.0
    %1027 = vmatpush.msra.mxu0 0.0
    %1028 = vmatpush.msra.mxu0 0.0
    %1029 = vmatpush.msra.mxu0 0.0
    %1030 = vmatpush.msra.mxu0 0.0
    %1031 = vmatpush.msra.mxu0 0.0
    %1032 = vmatpush.msra.mxu0 0.0
    %1033 = vmatpush.msra.mxu0 0.0
    %1034 = vmatpush.msra.mxu0 0.0
    %1035 = vmatpush.msra.mxu0 0.0
    %1036 = vmatpush.msra.mxu0 0.0
    %1037 = vmatpush.msra.mxu0 %v420
    %1038 = vmatpush.msra.mxu0 %v419
    %1039 = vmatpush.msra.mxu0 %v418
    %1040 = vmatpush.msra.mxu0 %v417
    %1041 = vmatmul.f32.gmra.mxu0 %v1021
    %v1042 = vpop.f32.mrf.mxu0
    %v1043 = vadd.f32 0.0, %v1042
    %1044 = vmatmul.f32.gmra.mxu0 %v1023
    %v1045 = vpop.f32.mrf.mxu0
    %v1046 = vadd.f32 0.0, %v1045
    %1047 = vdwg.mxu0
    %v1048 = vadd.f32 %v400, %v1043
    %v1049 = vadd.f32 %v403, %v1046
    %v1050 = vxor.u32 %v1048, 2147483648
    %v1051 = vxor.u32 %v1049, 2147483648
    %v1052 = vmul.f32 %v1050, 1.442695
    %v1053 = vpow.pop %v1052
    %v1054 = vmul.f32 %v1051, 1.442695
    %v1055 = vpow.pop %v1054
    %v1056 = vadd.f32 %v1053, 1.0
    %v1057 = vadd.f32 %v1055, 1.0
    %v1058 = vrcp.pop %v1056
    %v1059 = vmul.f32 %v1056, %v1058
    %v1060 = vsub.f32 1.0, %v1059
    %v1061 = vmul.f32 %v1058, %v1060
    %v1062 = vadd.f32 %v1058, %v1061
    %vm1063 = vweird.f32 %v1056
    %vm1064 = vweird.f32 %v1058
    %vm1065 = vmor %vm1063, %vm1064
    %v1066 = vsel %vm1065, %v1058, %v1062
    %v1067 = vand.u32 2147483647, %v1056
    %vm1068 = vcmp.eq.f32.partialorder %v1067, 8.507059e+37
    %v1069 = vand.u32 %v1056, 2147483648
    %v1070 = vor.u32 1.1754944e-38, %v1069
    %v1071 = vsel %vm1068, %v1070, %v1066
    %v1072 = vmul.f32 1.0, %v1071
    %v1073 = vrcp.pop %v1057
    %v1074 = vmul.f32 %v1057, %v1073
    %v1075 = vsub.f32 1.0, %v1074
    %v1076 = vmul.f32 %v1073, %v1075
    %v1077 = vadd.f32 %v1073, %v1076
    %vm1078 = vweird.f32 %v1057
    %vm1079 = vweird.f32 %v1073
    %vm1080 = vmor %vm1078, %vm1079
    %v1081 = vsel %vm1080, %v1073, %v1077
    %v1082 = vand.u32 2147483647, %v1057
    %vm1083 = vcmp.eq.f32.partialorder %v1082, 8.507059e+37
    %v1084 = vand.u32 %v1057, 2147483648
    %v1085 = vor.u32 1.1754944e-38, %v1084
    %v1086 = vsel %vm1083, %v1085, %v1081
    %v1087 = vmul.f32 1.0, %v1086
    %v1088 = vadd.f32 %v1043, %v491
    %v1089 = vadd.f32 %v1046, %v491
    %1092 = vrot.lane.b32.xlu0 %v1088, 64
    %v1093 = vpop.permute.xlu0 %1092
    %1094 = vrot.lane.b32.xlu0 %v1089, 64
    %v1095 = vpop.permute.xlu0 %1094
    %v1098 = vmul.f32 %v1072, %v1093
    %v1099 = vmul.f32 %v1087, %v1095
    %1102 = vrot.lane.b32.xlu0 %v1098, 64
    %v1103 = vpop.permute.xlu0 %1102
    %1104 = vrot.lane.b32.xlu0 %v1099, 64
    %v1105 = vpop.permute.xlu0 %1104
    %v1108 = vadd.f32 %v400, %v1103
    %v1109 = vadd.f32 %v403, %v1105
    %v1110 = vtanh.pop %v1108
    %v1111 = vtanh.pop %v1109
    %v1112 = vsub.f32 %v1013, %v1110
    %v1113 = vsub.f32 %v1014, %v1111
    %1116 = vrot.lane.b32.xlu0 %v1112, 96
    %v1117 = vpop.permute.xlu0 %1116
    %1118 = vrot.lane.b32.xlu0 %v1113, 96
    %v1119 = vpop.permute.xlu0 %1118
    %v1122 = vmul.f32 %v1072, %v1117
    %v1123 = vmul.f32 %v1087, %v1119
    %1126 = vrot.lane.b32.xlu0 %v1122, 32
    %v1127 = vpop.permute.xlu0 %1126
    %1128 = vrot.lane.b32.xlu0 %v1123, 32
    %v1129 = vpop.permute.xlu0 %1128
    %v1132 = vadd.f32 %v1110, %v1127
    %v1133 = vadd.f32 %v1111, %v1129
    %1136 = vrot.lane.b32.xlu0 %v1132, 64
    %v1137 = vpop.permute.xlu0 %1136
    %1138 = vrot.lane.b32.xlu0 %v1133, 64
    %v1139 = vpop.permute.xlu0 %1138
    %v1140 = vsel %vm303, %v1137, 0
    %v1142 = vsel %vm303, %v1139, 0
    %1144 = vmatpush.msra.mxu0 0.0
    %1145 = vmatpush.msra.mxu0 0.0
    %1146 = vmatpush.msra.mxu0 0.0
    %1147 = vmatpush.msra.mxu0 0.0
    %1148 = vmatpush.msra.mxu0 0.0
    %1149 = vmatpush.msra.mxu0 0.0
    %1150 = vmatpush.msra.mxu0 0.0
    %1151 = vmatpush.msra.mxu0 0.0
    %1152 = vmatpush.msra.mxu0 0.0
    %1153 = vmatpush.msra.mxu0 0.0
    %1154 = vmatpush.msra.mxu0 0.0
    %1155 = vmatpush.msra.mxu0 0.0
    %1156 = vmatpush.msra.mxu0 %v420
    %1157 = vmatpush.msra.mxu0 %v419
    %1158 = vmatpush.msra.mxu0 %v418
    %1159 = vmatpush.msra.mxu0 %v417
    %1160 = vmatmul.f32.gmra.mxu0 %v1140
    %v1161 = vpop.f32.mrf.mxu0
    %v1162 = vadd.f32 0.0, %v1161
    %1163 = vmatmul.f32.gmra.mxu0 %v1142
    %v1164 = vpop.f32.mrf.mxu0
    %v1165 = vadd.f32 0.0, %v1164
    %1166 = vdwg.mxu0
    %v1167 = vadd.f32 %v406, %v1162
    %v1168 = vadd.f32 %v409, %v1165
    %v1169 = vxor.u32 %v1167, 2147483648
    %v1170 = vxor.u32 %v1168, 2147483648
    %v1171 = vmul.f32 %v1169, 1.442695
    %v1172 = vpow.pop %v1171
    %v1173 = vmul.f32 %v1170, 1.442695
    %v1174 = vpow.pop %v1173
    %v1175 = vadd.f32 %v1172, 1.0
    %v1176 = vadd.f32 %v1174, 1.0
    %v1177 = vrcp.pop %v1175
    %v1178 = vmul.f32 %v1175, %v1177
    %v1179 = vsub.f32 1.0, %v1178
    %v1180 = vmul.f32 %v1177, %v1179
    %v1181 = vadd.f32 %v1177, %v1180
    %vm1182 = vweird.f32 %v1175
    %vm1183 = vweird.f32 %v1177
    %vm1184 = vmor %vm1182, %vm1183
    %v1185 = vsel %vm1184, %v1177, %v1181
    %v1186 = vand.u32 2147483647, %v1175
    %vm1187 = vcmp.eq.f32.partialorder %v1186, 8.507059e+37
    %v1188 = vand.u32 %v1175, 2147483648
    %v1189 = vor.u32 1.1754944e-38, %v1188
    %v1190 = vsel %vm1187, %v1189, %v1185
    %v1191 = vmul.f32 1.0, %v1190
    %v1192 = vrcp.pop %v1176
    %v1193 = vmul.f32 %v1176, %v1192
    %v1194 = vsub.f32 1.0, %v1193
    %v1195 = vmul.f32 %v1192, %v1194
    %v1196 = vadd.f32 %v1192, %v1195
    %vm1197 = vweird.f32 %v1176
    %vm1198 = vweird.f32 %v1192
    %vm1199 = vmor %vm1197, %vm1198
    %v1200 = vsel %vm1199, %v1192, %v1196
    %v1201 = vand.u32 2147483647, %v1176
    %vm1202 = vcmp.eq.f32.partialorder %v1201, 8.507059e+37
    %v1203 = vand.u32 %v1176, 2147483648
    %v1204 = vor.u32 1.1754944e-38, %v1203
    %v1205 = vsel %vm1202, %v1204, %v1200
    %v1206 = vmul.f32 1.0, %v1205
    %v1207 = vadd.f32 %v1162, %v491
    %v1208 = vadd.f32 %v1165, %v491
    %1211 = vrot.lane.b32.xlu0 %v1207, 64
    %v1212 = vpop.permute.xlu0 %1211
    %1213 = vrot.lane.b32.xlu0 %v1208, 64
    %v1214 = vpop.permute.xlu0 %1213
    %v1217 = vmul.f32 %v1191, %v1212
    %v1218 = vmul.f32 %v1206, %v1214
    %1221 = vrot.lane.b32.xlu0 %v1217, 64
    %v1222 = vpop.permute.xlu0 %1221
    %1223 = vrot.lane.b32.xlu0 %v1218, 64
    %v1224 = vpop.permute.xlu0 %1223
    %v1227 = vadd.f32 %v406, %v1222
    %v1228 = vadd.f32 %v409, %v1224
    %v1229 = vtanh.pop %v1227
    %v1230 = vtanh.pop %v1228
    %v1231 = vsub.f32 %v1132, %v1229
    %v1232 = vsub.f32 %v1133, %v1230
    %1235 = vrot.lane.b32.xlu0 %v1231, 96
    %v1236 = vpop.permute.xlu0 %1235
    %1237 = vrot.lane.b32.xlu0 %v1232, 96
    %v1238 = vpop.permute.xlu0 %1237
    %v1241 = vmul.f32 %v1191, %v1236
    %v1242 = vmul.f32 %v1206, %v1238
    %1245 = vrot.lane.b32.xlu0 %v1241, 32
    %v1246 = vpop.permute.xlu0 %1245
    %1247 = vrot.lane.b32.xlu0 %v1242, 32
    %v1248 = vpop.permute.xlu0 %1247
    %v1251 = vadd.f32 %v1229, %v1246
    %v1252 = vadd.f32 %v1230, %v1248
    %1255 = vrot.lane.b32.xlu0 %v1251, 64
    %v1256 = vpop.permute.xlu0 %1255
    %1257 = vrot.lane.b32.xlu0 %v1252, 64
    %v1258 = vpop.permute.xlu0 %1257
    %v1259 = vsel %vm303, %v1256, 0
    %v1261 = vsel %vm303, %v1258, 0
    %1263 = vmatpush.msra.mxu0 0.0
    %1264 = vmatpush.msra.mxu0 0.0
    %1265 = vmatpush.msra.mxu0 0.0
    %1266 = vmatpush.msra.mxu0 0.0
    %1267 = vmatpush.msra.mxu0 0.0
    %1268 = vmatpush.msra.mxu0 0.0
    %1269 = vmatpush.msra.mxu0 0.0
    %1270 = vmatpush.msra.mxu0 0.0
    %1271 = vmatpush.msra.mxu0 0.0
    %1272 = vmatpush.msra.mxu0 0.0
    %1273 = vmatpush.msra.mxu0 0.0
    %1274 = vmatpush.msra.mxu0 0.0
    %1275 = vmatpush.msra.mxu0 %v420
    %1276 = vmatpush.msra.mxu0 %v419
    %1277 = vmatpush.msra.mxu0 %v418
    %1278 = vmatpush.msra.mxu0 %v417
    %1279 = vmatmul.f32.gmra.mxu0 %v1259
    %v1280 = vpop.f32.mrf.mxu0
    %v1281 = vadd.f32 0.0, %v1280
    %1282 = vmatmul.f32.gmra.mxu0 %v1261
    %v1283 = vpop.f32.mrf.mxu0
    %v1284 = vadd.f32 0.0, %v1283
    %1285 = vdwg.mxu0
    %v1286 = vadd.f32 %v412, %v1281
    %v1287 = vadd.f32 %v415, %v1284
    %v1288 = vxor.u32 %v1286, 2147483648
    %v1289 = vxor.u32 %v1287, 2147483648
    %v1290 = vmul.f32 %v1288, 1.442695
    %v1291 = vpow.pop %v1290
    %v1292 = vmul.f32 %v1289, 1.442695
    %v1293 = vpow.pop %v1292
    %v1294 = vadd.f32 %v1291, 1.0
    %v1295 = vadd.f32 %v1293, 1.0
    %v1296 = vrcp.pop %v1294
    %v1297 = vmul.f32 %v1294, %v1296
    %v1298 = vsub.f32 1.0, %v1297
    %v1299 = vmul.f32 %v1296, %v1298
    %v1300 = vadd.f32 %v1296, %v1299
    %vm1301 = vweird.f32 %v1294
    %vm1302 = vweird.f32 %v1296
    %vm1303 = vmor %vm1301, %vm1302
    %v1304 = vsel %vm1303, %v1296, %v1300
    %v1305 = vand.u32 2147483647, %v1294
    %vm1306 = vcmp.eq.f32.partialorder %v1305, 8.507059e+37
    %v1307 = vand.u32 %v1294, 2147483648
    %v1308 = vor.u32 1.1754944e-38, %v1307
    %v1309 = vsel %vm1306, %v1308, %v1304
    %v1310 = vmul.f32 1.0, %v1309
    %v1311 = vrcp.pop %v1295
    %v1312 = vmul.f32 %v1295, %v1311
    %v1313 = vsub.f32 1.0, %v1312
    %v1314 = vmul.f32 %v1311, %v1313
    %v1315 = vadd.f32 %v1311, %v1314
    %vm1316 = vweird.f32 %v1295
    %vm1317 = vweird.f32 %v1311
    %vm1318 = vmor %vm1316, %vm1317
    %v1319 = vsel %vm1318, %v1311, %v1315
    %v1320 = vand.u32 2147483647, %v1295
    %vm1321 = vcmp.eq.f32.partialorder %v1320, 8.507059e+37
    %v1322 = vand.u32 %v1295, 2147483648
    %v1323 = vor.u32 1.1754944e-38, %v1322
    %v1324 = vsel %vm1321, %v1323, %v1319
    %v1325 = vmul.f32 1.0, %v1324
    %v1326 = vadd.f32 %v1281, %v491
    %v1327 = vadd.f32 %v1284, %v491
    %1330 = vrot.lane.b32.xlu0 %v1326, 64
    %v1331 = vpop.permute.xlu0 %1330
    %1332 = vrot.lane.b32.xlu0 %v1327, 64
    %v1333 = vpop.permute.xlu0 %1332
    %v1336 = vmul.f32 %v1310, %v1331
    %v1337 = vmul.f32 %v1325, %v1333
    %1340 = vrot.lane.b32.xlu0 %v1336, 64
    %v1341 = vpop.permute.xlu0 %1340
    %1342 = vrot.lane.b32.xlu0 %v1337, 64
    %v1343 = vpop.permute.xlu0 %1342
    %v1346 = vadd.f32 %v412, %v1341
    %v1347 = vadd.f32 %v415, %v1343
    %v1348 = vtanh.pop %v1346
    %v1349 = vtanh.pop %v1347
    %v1350 = vsub.f32 %v1251, %v1348
    %v1351 = vsub.f32 %v1252, %v1349
    %1354 = vrot.lane.b32.xlu0 %v1350, 96
    %v1355 = vpop.permute.xlu0 %1354
    %1356 = vrot.lane.b32.xlu0 %v1351, 96
    %v1357 = vpop.permute.xlu0 %1356
    %v1360 = vmul.f32 %v1310, %v1355
    %v1361 = vmul.f32 %v1325, %v1357
    %1364 = vrot.lane.b32.xlu0 %v1360, 32
    %v1365 = vpop.permute.xlu0 %1364
    %1366 = vrot.lane.b32.xlu0 %v1361, 32
    %v1367 = vpop.permute.xlu0 %1366
    %v1370 = vadd.f32 %v1348, %v1365
    %v1371 = vadd.f32 %v1349, %v1367
    %1372 = vrot.lane.b32.xlu0 %v293, 64
    %v1373 = vpop.permute.xlu0 %1372
    %1374 = vrot.lane.b32.xlu0 %v294, 64
    %v1375 = vpop.permute.xlu0 %1374
    %v1378 = vadd.f32 %v1370, %v1373
    %v1379 = vadd.f32 %v1371, %v1375
    %v1380 = vld [vmem:[%s9] sm:$0xff]
    %v1381 = vld [vmem:[%s9 + $0x8] sm:$0xff]
    %v1382 = vld [vmem:[%s9 + $0x10] sm:$0xff]
    %v1383 = vld [vmem:[%s9 + $0x18] sm:$0xff]
    %v1384 = vld [vmem:[%s10] sm:$0x1]
    %v1386 = vperm.slane %v1384, 0
    %1390 = vrot.lane.b32.xlu0 %v1378, 64
    %v1391 = vpop.permute.xlu0 %1390
    %1392 = vrot.lane.b32.xlu0 %v1379, 64
    %v1393 = vpop.permute.xlu0 %1392
    %v1394 = vsel %vm303, %v1391, 0
    %v1396 = vsel %vm303, %v1393, 0
    %1398 = vmatpush.msra.mxu0 0.0
    %1399 = vmatpush.msra.mxu0 0.0
    %1400 = vmatpush.msra.mxu0 0.0
    %1401 = vmatpush.msra.mxu0 0.0
    %1402 = vmatpush.msra.mxu0 0.0
    %1403 = vmatpush.msra.mxu0 0.0
    %1404 = vmatpush.msra.mxu0 0.0
    %1405 = vmatpush.msra.mxu0 0.0
    %1406 = vmatpush.msra.mxu0 0.0
    %1407 = vmatpush.msra.mxu0 0.0
    %1408 = vmatpush.msra.mxu0 0.0
    %1409 = vmatpush.msra.mxu0 0.0
    %1410 = vmatpush.msra.mxu0 %v1383
    %1411 = vmatpush.msra.mxu0 %v1382
    %1412 = vmatpush.msra.mxu0 %v1381
    %1413 = vmatpush.msra.mxu0 %v1380
    %1414 = vmatmul.f32.gmra.mxu0 %v1394
    %v1415 = vpop.f32.mrf.mxu0
    %v1416 = vadd.f32 %v1386, %v1415
    %1417 = vmatmul.f32.gmra.mxu0 %v1396
    %v1418 = vpop.f32.mrf.mxu0
    %v1419 = vadd.f32 %v1386, %v1418
    %1420 = vdwg.mxu0
    %v1421 = vmax.f32 %v1416, 0.0
    %v1422 = vmax.f32 %v1419, 0.0
    %v1423 = vld [vmem:[%s11] sm:$0xff]
    %v1424 = vld [vmem:[%s11 + $0x8] sm:$0xff]
    %v1425 = vld [vmem:[%s11 + $0x10] sm:$0xff]
    %v1426 = vld [vmem:[%s11 + $0x18] sm:$0xff]
    %v1427 = vld [vmem:[%s12] sm:$0x1]
    %v1429 = vperm.slane %v1427, 0
    %v1432 = vsel %vm303, %v1421, 0
    %v1435 = vsel %vm303, %v1422, 0
    %1437 = vmatpush.msra.mxu0 0.0
    %1438 = vmatpush.msra.mxu0 0.0
    %1439 = vmatpush.msra.mxu0 0.0
    %1440 = vmatpush.msra.mxu0 0.0
    %1441 = vmatpush.msra.mxu0 0.0
    %1442 = vmatpush.msra.mxu0 0.0
    %1443 = vmatpush.msra.mxu0 0.0
    %1444 = vmatpush.msra.mxu0 0.0
    %1445 = vmatpush.msra.mxu0 0.0
    %1446 = vmatpush.msra.mxu0 0.0
    %1447 = vmatpush.msra.mxu0 0.0
    %1448 = vmatpush.msra.mxu0 0.0
    %1449 = vmatpush.msra.mxu0 %v1426
    %1450 = vmatpush.msra.mxu0 %v1425
    %1451 = vmatpush.msra.mxu0 %v1424
    %1452 = vmatpush.msra.mxu0 %v1423
    %1453 = vmatmul.f32.gmra.mxu0 %v1432
    %v1454 = vpop.f32.mrf.mxu0
    %v1455 = vadd.f32 %v1429, %v1454
    %1456 = vmatmul.f32.gmra.mxu0 %v1435
    %v1457 = vpop.f32.mrf.mxu0
    %v1458 = vadd.f32 %v1429, %v1457
    %1459 = vdwg.mxu0
    %vm1460 = vcmask 31744
    %1461 = vst.msk [vmem:[%s13] sm:$0xff] %vm1460, %v1455
    %vm1462 = vcmask 24576
    %1463 = vst.msk [vmem:[%s13 + $0x8] sm:$0x1] %vm1462, %v1458
    // Predicated region
    $region58: #{net_forward.1} parent=1 // pred_check
      _
    $region59: #{net_forward.1} parent=1 // pred_check_branch
      %1465 = sbr.rel (0) target = $region61
    $region60: #{net_forward.1} parent=1 // pred_region
      _
    $region61: #{net_forward.1} parent=1 // pred_fallthru
      _
    // Predicated region
    $region62: #{net_forward.1} parent=1 // pred_check
      _
    $region63: #{net_forward.1} parent=1 // pred_check_branch
      %1467 = sbr.rel (0) target = $region65
    $region64: #{net_forward.1} parent=1 // pred_region
      _
    $region65: #{net_forward.1} parent=1 // pred_fallthru
      _
    %1468 = vsyncpa [#allocation5], 1

</llo_original>
